<compile_context>
chip_gen: v7x
topology: tpu7x:2x2x1
jax: 0.10.0
libtpu: 0.0.40
codegen_flags: <defaults>
</compile_context>

<pallas_src>
import functools

import jax
import jax.numpy as jnp
import numpy as np
from jax import lax
from jax.experimental import pallas as pl
from jax.experimental.pallas import tpu as pltpu


def path_embedding_kernel(
    xg_ref,       # (Bt, L, H)  x[:, path_list, :]               (mxu_dtype)
    w_ref,        # (Bt, L)     path_weight gathered by path_index  (f32)
    S_ref,        # (L, L)      same-segment matrix M @ M.T       (mxu_dtype)
    emb_ref,      # (L, E)      edge_emb + positional_emb         (f32)
    gamma_ref, beta_ref,        # (1, H)            LayerNorm params (f32)
    Wp_ref, bp_ref,             # (H, E) mxu, (1, E) f32   path_proj
    W1_ref, b1_ref,             # (E, R) mxu, (1, R) f32   aggregate_proj[0]
    W2_ref, b2_ref,             # (R, R) mxu, (1, R) f32   aggregate_proj[3]
    K_ref,        # (R, H)      K[r, r*E + e] = 1  (repeat-each selector, mxu)
    J_ref,        # (E, H)      J[e, r*E + e] = 1  (tile selector, mxu)
    out_ref,      # (Bt, H)     f32
    *, mxu_dtype, inv_p,
):
    f32 = jnp.float32
    Bt, L, H = xg_ref.shape
    E = Wp_ref.shape[1]
    R = W1_ref.shape[1]

    # ---- LayerNorm (f32) + path_proj on the flattened (Bt*L, H) slab -------
    x = xg_ref[...].astype(f32).reshape(Bt * L, H)
    mu = jnp.mean(x, axis=-1, keepdims=True)
    var = jnp.mean((x - mu) ** 2, axis=-1, keepdims=True)
    xn = (x - mu) * lax.rsqrt(var + 1e-5)
    xn = xn * gamma_ref[...] + beta_ref[...]
    xp = jnp.dot(xn.astype(mxu_dtype), Wp_ref[...],
                 preferred_element_type=f32) + bp_ref[...]               # (Bt*L, E)
    xg = xp.reshape(Bt, L, E) + emb_ref[...][None]                       # (Bt, L, E)
    xg_m = xg.reshape(Bt * L, E).astype(mxu_dtype)

    # ---- aggregate_proj: Linear(E->R) -> Tanh -> Dropout(eval) -> Linear(R->R)
    # TODO(synk): training-mode Dropout masking is not applied (eval identity).
    h1 = jnp.tanh(jnp.dot(xg_m, W1_ref[...],
                          preferred_element_type=f32) + b1_ref[...])
    s = jnp.dot(h1.astype(mxu_dtype), W2_ref[...],
                preferred_element_type=f32) + b2_ref[...]                # (Bt*L, R)
    s3 = s.reshape(Bt, L, R)

    # ---- scatter_softmax over path elements sharing path_index (f32) -------
    # Softmax is shift-invariant, so stabilize with the *global* per-(b, r)
    # max over L (one sublane reduce) instead of the per-segment max: this
    # removes the (Bt, P, L, R) masked-max blow-up and both gather-back
    # matmuls.  Safe here because s is tanh-bounded through W2, so
    # exp(s - global_max) cannot underflow for an entire segment.
    gmax = jnp.max(s3, axis=1, keepdims=True)                            # (Bt, 1, R)
    e = jnp.exp(s3 - gmax)                                               # (Bt, L, R)
    # Per-element denominator = same-segment sum, in ONE contraction with the
    # precomputed S = M @ M.T (replaces seg_sum + gather-back of v2).
    Sb = jnp.broadcast_to(S_ref[...][None], (Bt, L, L))
    denom = lax.dot_general(Sb, e.astype(mxu_dtype),
                            (((2,), (1,)), ((0,), (0,))),
                            preferred_element_type=f32)                  # (Bt, L, R)
    sm = e / denom

    # ---- weighted segment-sum * path_weight + mean over paths, fused -------
    #   out[b, r*E + e] = inv_p * sum_l w[b, l] * sm[b, l, r] * xg[b, l, e]
    # R, E << 128, so instead of Bt degenerate (R, L) x (L, E) MXU calls the
    # (r, e) outer product is expanded to H lanes with two tiny 0/1 selector
    # matmuls and reduced over L on the VPU/XLU, giving one lane-dense
    # (Bt, H) store.
    # TODO(synk): switch to a batched MXU dot_general when E >= 128.
    wsm = (w_ref[...][:, :, None] * sm).reshape(Bt * L, R)               # (Bt*L, R)
    t = (jnp.dot(wsm.astype(mxu_dtype), K_ref[...], preferred_element_type=f32)
         * jnp.dot(xg_m, J_ref[...], preferred_element_type=f32))        # (Bt*L, H)
    out_ref[...] = jnp.sum(t.reshape(Bt, L, H), axis=1) * inv_p


def path_embedding_forward(x, path_list, path_index, path_edge_type,
                           path_positions, path_weight, params, num_paths,
                           *, block_b=None, mxu_dtype=jnp.bfloat16,
                           vmem_limit_bytes=48 * 1024 * 1024,
                           single_buffer_consts=False):
    """Returns h of shape (B, hidden_size), matching PathEmbedding.forward (eval)."""
    gamma, beta, Wp, bp, W1, b1, W2, b2, edge_table, pos_table = params
    B, N, H = x.shape
    E = Wp.shape[1]
    R = W1.shape[1]
    P = int(num_paths)
    L = int(path_list.shape[0])
    assert H == R * E, "hidden_size must equal r * (hidden_size // r)"

    # ---- XLA-side glue (cheap, one-time) ------------------------------------
    # * Gather the path node rows once: removes the in-kernel one-hot gather
    #   matmul (and its Bt-unrolled batched dot_generals); LayerNorm +
    #   path_proj then run on L rows per batch element instead of N.
    #   TODO(synk): if L >> N, move the gather back in-kernel (scalar-prefetched
    #   path_list + take on the VMEM projection tile) to avoid recompute.
    # * S = M @ M.T same-segment matrix: one contraction yields the softmax
    #   denominator for every path element.
    # * Embedding lookups and per-element path weight
    #   w[b, l] = path_weight[b, path_index[l], 0].
    # * K / J selectors pack the final (R, E) outer product into one H-lane
    #   slab inside the kernel without any batched matmul.
    x_paths = jnp.take(x, path_list, axis=1).astype(mxu_dtype)           # (B, L, H)
    M = jax.nn.one_hot(path_index, P, dtype=jnp.float32)                 # (L, P)
    S = (M @ M.T).astype(mxu_dtype)                                      # (L, L)
    emb_sum = (edge_table[path_edge_type]
               + pos_table[path_positions]).astype(jnp.float32)          # (L, E)
    w = jnp.take(path_weight[:, :, 0], path_index, axis=1)               # (B, L)
    K = jnp.repeat(jnp.eye(R, dtype=mxu_dtype), E, axis=1)               # (R, H)
    J = jnp.tile(jnp.eye(E, dtype=mxu_dtype), (1, R))                    # (E, H)
    # Pre-cast matmul weights once (no per-step converts, half the bf16 DMA).
    Wp_c = Wp.astype(mxu_dtype)
    W1_c = W1.astype(mxu_dtype)
    W2_c = W2.astype(mxu_dtype)

    # ---- batch-block size derived from the VMEM budget ----------------------
    xb = jnp.dtype(mxu_dtype).itemsize
    if block_b is None:
        # Rough per-batch-row footprint: double-buffered blocks + live f32
        # intermediates + the broadcast S operand of the denominator dot (the
        # first thing to blow the budget at large L).
        per_row = (2 * L * H * xb + 2 * (L + H) * 4
                   + 4 * (4 * L * H + 3 * L * E + 8 * L * R)
                   + L * L * xb)
        budget = int(0.4 * vmem_limit_bytes)
        block_b = (budget // max(per_row, 1)) // 8 * 8
        block_b = max(8, min(512, block_b))
    if B >= 16:
        # Keep >= 2 grid steps so the "parallel" batch axis can still split
        # across v7x's two TensorCores (v5e/v6e: single TC, no cost).
        block_b = min(block_b, max(8, (B // 2) // 8 * 8))
    Bt = max(8, (block_b // 8) * 8)
    nblk = pl.cdiv(B, Bt)
    Bp = nblk * Bt
    if Bp != B:
        x_paths = jnp.pad(x_paths, ((0, Bp - B), (0, 0), (0, 0)))
        w = jnp.pad(w, ((0, Bp - B), (0, 0)))

    # Grid-invariant operands: whole array every step (constant index_map).
    # pl.Buffered(1) single-buffers them (frees VMEM; mainly useful on v5e's
    # small default scoped VMEM limit).
    def const(a):
        kw = {}
        if single_buffer_consts:
            kw["pipeline_mode"] = pl.Buffered(1)
        return pl.BlockSpec(a.shape, lambda i, nd=a.ndim: (0,) * nd, **kw)

    kernel = functools.partial(path_embedding_kernel,
                               mxu_dtype=mxu_dtype, inv_p=1.0 / P)
    out = pl.pallas_call(
        kernel,
        out_shape=jax.ShapeDtypeStruct((Bp, H), jnp.float32),
        grid=(nblk,),
        in_specs=[
            pl.BlockSpec((Bt, L, H), lambda i: (i, 0, 0)),   # gathered x rows
            pl.BlockSpec((Bt, L), lambda i: (i, 0)),         # per-element weight
            const(S), const(emb_sum),
            const(gamma), const(beta),
            const(Wp_c), const(bp), const(W1_c), const(b1),
            const(W2_c), const(b2), const(K), const(J),
        ],
        out_specs=pl.BlockSpec((Bt, H), lambda i: (i, 0)),
        compiler_params=pltpu.CompilerParams(
            dimension_semantics=("parallel",),
            vmem_limit_bytes=vmem_limit_bytes),
    )(x_paths, w, S, emb_sum, gamma, beta, Wp_c, bp, W1_c, b1, W2_c, b2, K, J)
    return out[:B]


def ref_forward(x, path_list, path_index, path_edge_type, path_positions,
                path_weight, params, num_paths):
    """Pure-JAX reference (literal translation of the PyTorch forward, eval mode)."""
    gamma, beta, Wp, bp, W1, b1, W2, b2, edge_table, pos_table = params
    B, N, H = x.shape
    P = num_paths
    mu = x.mean(-1, keepdims=True)
    var = ((x - mu) ** 2).mean(-1, keepdims=True)
    xn = (x - mu) / jnp.sqrt(var + 1e-5) * gamma + beta
    xp = xn @ Wp + bp                                               # (B, N, E)
    xg = xp[:, path_list, :] + edge_table[path_edge_type][None] \
        + pos_table[path_positions][None]                           # (B, L, E)
    s = jnp.tanh(xg @ W1 + b1) @ W2 + b2                            # (B, L, R)
    s_t = jnp.moveaxis(s, 1, 0)                                     # (L, B, R)
    gmax = jax.ops.segment_max(s_t, path_index, num_segments=P)     # (P, B, R)
    e = jnp.exp(s_t - gmax[path_index])
    gsum = jax.ops.segment_sum(e, path_index, num_segments=P)
    sm = jnp.moveaxis(e / gsum[path_index], 0, 1)                   # (B, L, R)
    h = sm[:, :, :, None] * xg[:, :, None, :]                       # (B, L, R, E)
    hp = jax.ops.segment_sum(jnp.moveaxis(h, 1, 0), path_index,
                             num_segments=P)                        # (P, B, R, E)
    hp = jnp.moveaxis(hp, 0, 1).reshape(B, P, -1)                   # (B, P, H)
    hp = hp * path_weight
    return hp.mean(axis=1)                                          # (B, H)


if __name__ == "__main__":
    key = jax.random.PRNGKey(0)
    B, N = 16, 8                 # batch, num nodes
    H, R = 32, 4                 # hidden_size, r
    E = H // R                   # emb_size
    max_path_len = 4
    num_edges = 5

    # 6 paths with lengths [3, 2, 4, 2, 3, 2] -> L = 16 flattened path elements
    path_lens = [3, 2, 4, 2, 3, 2]
    P = len(path_lens)
    path_index = jnp.asarray(np.repeat(np.arange(P), path_lens), dtype=jnp.int32)
    path_positions = jnp.asarray(
        np.concatenate([np.arange(l) for l in path_lens]), dtype=jnp.int32)
    L = int(path_index.shape[0])

    keys = jax.random.split(key, 16)
    x = jax.random.normal(keys[0], (B, N, H), jnp.float32)
    path_list = jax.random.randint(keys[1], (L,), 0, N)
    path_edge_type = jax.random.randint(keys[2], (L,), 0, num_edges + 1)
    path_weight = jax.random.uniform(keys[3], (B, P, 1), jnp.float32, 0.5, 1.5)

    sc = 0.1
    gamma = 1.0 + sc * jax.random.normal(keys[4], (1, H), jnp.float32)
    beta = sc * jax.random.normal(keys[5], (1, H), jnp.float32)
    Wp = sc * jax.random.normal(keys[6], (H, E), jnp.float32)
    bp = sc * jax.random.normal(keys[7], (1, E), jnp.float32)
    W1 = sc * jax.random.normal(keys[8], (E, R), jnp.float32)
    b1 = sc * jax.random.normal(keys[9], (1, R), jnp.float32)
    W2 = sc * jax.random.normal(keys[10], (R, R), jnp.float32)
    b2 = sc * jax.random.normal(keys[11], (1, R), jnp.float32)
    edge_table = sc * jax.random.normal(keys[12], (num_edges + 1, E), jnp.float32)
    pos_table = sc * jax.random.normal(keys[13], (max_path_len, E), jnp.float32)
    params = (gamma, beta, Wp, bp, W1, b1, W2, b2, edge_table, pos_table)

    ref = ref_forward(x, path_list, path_index, path_edge_type, path_positions,
                      path_weight, params, P)

    # f32 MXU path: tight parity with the reference.
    out = path_embedding_forward(x, path_list, path_index, path_edge_type,
                                 path_positions, path_weight, params, P,
                                 mxu_dtype=jnp.float32)
    out = jax.block_until_ready(out)
    assert out.shape == (B, H)
    np.testing.assert_allclose(np.asarray(out), np.asarray(ref),
                               rtol=1e-4, atol=1e-4)

    # Production default: bf16 at the MXU boundary (LN / softmax stay f32).
    out_bf16 = path_embedding_forward(x, path_list, path_index, path_edge_type,
                                      path_positions, path_weight, params, P)
    out_bf16 = jax.block_until_ready(out_bf16)
    np.testing.assert_allclose(np.asarray(out_bf16), np.asarray(ref),
                               rtol=2e-2, atol=2e-2)

    print("KERNEL_OK")
</pallas_src>

<mosaic_0001>
module attributes {stable_mosaic.version = 11 : i64} {
  func.func @path_embedding_kernel(%arg0: i32, %arg1: memref<8x16x32xf32, #tpu.memory_space<vmem>>, %arg2: memref<8x16xf32, #tpu.memory_space<vmem>>, %arg3: memref<16x16xf32, #tpu.memory_space<vmem>>, %arg4: memref<16x8xf32, #tpu.memory_space<vmem>>, %arg5: memref<1x32xf32, #tpu.memory_space<vmem>>, %arg6: memref<1x32xf32, #tpu.memory_space<vmem>>, %arg7: memref<32x8xf32, #tpu.memory_space<vmem>>, %arg8: memref<1x8xf32, #tpu.memory_space<vmem>>, %arg9: memref<8x4xf32, #tpu.memory_space<vmem>>, %arg10: memref<1x4xf32, #tpu.memory_space<vmem>>, %arg11: memref<4x4xf32, #tpu.memory_space<vmem>>, %arg12: memref<1x4xf32, #tpu.memory_space<vmem>>, %arg13: memref<4x32xf32, #tpu.memory_space<vmem>>, %arg14: memref<8x32xf32, #tpu.memory_space<vmem>>, %arg15: memref<8x32xf32, #tpu.memory_space<vmem>>) attributes {dimension_semantics = [#tpu.dimension_semantics<parallel>], iteration_bounds = array<i64: 2>, scalar_prefetch = 0 : i64, scratch_operands = 0 : i64, tpu.core_type = #tpu.core_type<tc>, window_params = [{transform_indices = @transform_0, window_bounds = array<i64: 8, 16, 32>}, {transform_indices = @transform_1, window_bounds = array<i64: 8, 16>}, {pipeline_mode = #tpu.pipeline_mode<synchronous>, transform_indices = @transform_2, window_bounds = array<i64: 16, 16>}, {pipeline_mode = #tpu.pipeline_mode<synchronous>, transform_indices = @transform_3, window_bounds = array<i64: 16, 8>}, {pipeline_mode = #tpu.pipeline_mode<synchronous>, transform_indices = @transform_4, window_bounds = array<i64: 1, 32>}, {pipeline_mode = #tpu.pipeline_mode<synchronous>, transform_indices = @transform_5, window_bounds = array<i64: 1, 32>}, {pipeline_mode = #tpu.pipeline_mode<synchronous>, transform_indices = @transform_6, window_bounds = array<i64: 32, 8>}, {pipeline_mode = #tpu.pipeline_mode<synchronous>, transform_indices = @transform_7, window_bounds = array<i64: 1, 8>}, {pipeline_mode = #tpu.pipeline_mode<synchronous>, transform_indices = @transform_8, window_bounds = array<i64: 8, 4>}, {pipeline_mode = #tpu.pipeline_mode<synchronous>, transform_indices = @transform_9, window_bounds = array<i64: 1, 4>}, {pipeline_mode = #tpu.pipeline_mode<synchronous>, transform_indices = @transform_10, window_bounds = array<i64: 4, 4>}, {pipeline_mode = #tpu.pipeline_mode<synchronous>, transform_indices = @transform_11, window_bounds = array<i64: 1, 4>}, {pipeline_mode = #tpu.pipeline_mode<synchronous>, transform_indices = @transform_12, window_bounds = array<i64: 4, 32>}, {pipeline_mode = #tpu.pipeline_mode<synchronous>, transform_indices = @transform_13, window_bounds = array<i64: 8, 32>}, {transform_indices = @transform_14, window_bounds = array<i64: 8, 32>}]} {
    %c0 = arith.constant 0 : index
    %c0_0 = arith.constant 0 : index
    %c0_1 = arith.constant 0 : index
    %0 = vector.load %arg1[%c0, %c0_0, %c0_1] : memref<8x16x32xf32, #tpu.memory_space<vmem>>, vector<8x16x32xf32>
    %1 = vector.shape_cast %0 : vector<8x16x32xf32> to vector<128x32xf32>
    %cst = arith.constant dense<0.000000e+00> : vector<128xf32>
    %2 = vector.multi_reduction <add>, %1, %cst [1] : vector<128x32xf32> to vector<128xf32>
    %3 = vector.shape_cast %2 : vector<128xf32> to vector<128x1xf32>
    %cst_2 = arith.constant 3.200000e+01 : f32
    %4 = vector.broadcast %cst_2 : f32 to vector<128x1xf32>
    %5 = arith.divf %3, %4 : vector<128x1xf32>
    %6 = vector.broadcast %5 : vector<128x1xf32> to vector<128x32xf32>
    %7 = arith.subf %1, %6 : vector<128x32xf32>
    %8 = arith.mulf %7, %7 : vector<128x32xf32>
    %cst_3 = arith.constant dense<0.000000e+00> : vector<128xf32>
    %9 = vector.multi_reduction <add>, %8, %cst_3 [1] : vector<128x32xf32> to vector<128xf32>
    %10 = vector.shape_cast %9 : vector<128xf32> to vector<128x1xf32>
    %cst_4 = arith.constant 3.200000e+01 : f32
    %11 = vector.broadcast %cst_4 : f32 to vector<128x1xf32>
    %12 = arith.divf %10, %11 : vector<128x1xf32>
    %13 = vector.broadcast %5 : vector<128x1xf32> to vector<128x32xf32>
    %14 = arith.subf %1, %13 : vector<128x32xf32>
    %cst_5 = arith.constant 9.99999974E-6 : f32
    %15 = vector.broadcast %cst_5 : f32 to vector<128x1xf32>
    %16 = arith.addf %12, %15 : vector<128x1xf32>
    %17 = math.rsqrt %16 : vector<128x1xf32>
    %18 = vector.broadcast %17 : vector<128x1xf32> to vector<128x32xf32>
    %19 = arith.mulf %14, %18 : vector<128x32xf32>
    %c0_6 = arith.constant 0 : index
    %c0_7 = arith.constant 0 : index
    %20 = vector.load %arg5[%c0_6, %c0_7] : memref<1x32xf32, #tpu.memory_space<vmem>>, vector<1x32xf32>
    %21 = vector.broadcast %20 : vector<1x32xf32> to vector<128x32xf32>
    %22 = arith.mulf %19, %21 : vector<128x32xf32>
    %c0_8 = arith.constant 0 : index
    %c0_9 = arith.constant 0 : index
    %23 = vector.load %arg6[%c0_8, %c0_9] : memref<1x32xf32, #tpu.memory_space<vmem>>, vector<1x32xf32>
    %24 = vector.broadcast %23 : vector<1x32xf32> to vector<128x32xf32>
    %25 = arith.addf %22, %24 : vector<128x32xf32>
    %c0_10 = arith.constant 0 : index
    %c0_11 = arith.constant 0 : index
    %26 = vector.load %arg7[%c0_10, %c0_11] : memref<32x8xf32, #tpu.memory_space<vmem>>, vector<32x8xf32>
    %cst_12 = arith.constant dense<0.000000e+00> : vector<128x8xf32>
    %27 = tpu.matmul %25, %26, %cst_12 {dimension_numbers = #tpu.dot_dimension_numbers<[1], [0], [0], [1], [0, 0, 1, 1], [], []>} : vector<128x32xf32>, vector<32x8xf32>, vector<128x8xf32> -> vector<128x8xf32>
    %c0_13 = arith.constant 0 : index
    %c0_14 = arith.constant 0 : index
    %28 = vector.load %arg8[%c0_13, %c0_14] : memref<1x8xf32, #tpu.memory_space<vmem>>, vector<1x8xf32>
    %29 = vector.broadcast %28 : vector<1x8xf32> to vector<128x8xf32>
    %30 = arith.addf %27, %29 : vector<128x8xf32>
    %31 = vector.shape_cast %30 : vector<128x8xf32> to vector<8x16x8xf32>
    %c0_15 = arith.constant 0 : index
    %c0_16 = arith.constant 0 : index
    %32 = vector.load %arg4[%c0_15, %c0_16] : memref<16x8xf32, #tpu.memory_space<vmem>>, vector<16x8xf32>
    %33 = vector.shape_cast %32 : vector<16x8xf32> to vector<1x16x8xf32>
    %34 = vector.broadcast %33 : vector<1x16x8xf32> to vector<8x16x8xf32>
    %35 = arith.addf %31, %34 : vector<8x16x8xf32>
    %36 = vector.shape_cast %35 : vector<8x16x8xf32> to vector<128x8xf32>
    %c0_17 = arith.constant 0 : index
    %c0_18 = arith.constant 0 : index
    %37 = vector.load %arg9[%c0_17, %c0_18] : memref<8x4xf32, #tpu.memory_space<vmem>>, vector<8x4xf32>
    %cst_19 = arith.constant dense<0.000000e+00> : vector<128x4xf32>
    %38 = tpu.matmul %36, %37, %cst_19 {dimension_numbers = #tpu.dot_dimension_numbers<[1], [0], [0], [1], [0, 0, 1, 1], [], []>} : vector<128x8xf32>, vector<8x4xf32>, vector<128x4xf32> -> vector<128x4xf32>
    %c0_20 = arith.constant 0 : index
    %c0_21 = arith.constant 0 : index
    %39 = vector.load %arg10[%c0_20, %c0_21] : memref<1x4xf32, #tpu.memory_space<vmem>>, vector<1x4xf32>
    %40 = vector.broadcast %39 : vector<1x4xf32> to vector<128x4xf32>
    %41 = arith.addf %38, %40 : vector<128x4xf32>
    %42 = math.tanh %41 : vector<128x4xf32>
    %c0_22 = arith.constant 0 : index
    %c0_23 = arith.constant 0 : index
    %43 = vector.load %arg11[%c0_22, %c0_23] : memref<4x4xf32, #tpu.memory_space<vmem>>, vector<4x4xf32>
    %cst_24 = arith.constant dense<0.000000e+00> : vector<128x4xf32>
    %44 = tpu.matmul %42, %43, %cst_24 {dimension_numbers = #tpu.dot_dimension_numbers<[1], [0], [0], [1], [0, 0, 1, 1], [], []>} : vector<128x4xf32>, vector<4x4xf32>, vector<128x4xf32> -> vector<128x4xf32>
    %c0_25 = arith.constant 0 : index
    %c0_26 = arith.constant 0 : index
    %45 = vector.load %arg12[%c0_25, %c0_26] : memref<1x4xf32, #tpu.memory_space<vmem>>, vector<1x4xf32>
    %46 = vector.broadcast %45 : vector<1x4xf32> to vector<128x4xf32>
    %47 = arith.addf %44, %46 : vector<128x4xf32>
    %48 = vector.shape_cast %47 : vector<128x4xf32> to vector<8x16x4xf32>
    %cst_27 = arith.constant dense<0xFF800000> : vector<8x4xf32>
    %49 = vector.multi_reduction <maximumf>, %48, %cst_27 [1] : vector<8x16x4xf32> to vector<8x4xf32>
    %50 = vector.shape_cast %49 : vector<8x4xf32> to vector<8x1x4xf32>
    %51 = vector.broadcast %50 : vector<8x1x4xf32> to vector<8x16x4xf32>
    %52 = arith.subf %48, %51 : vector<8x16x4xf32>
    %53 = math.exp %52 : vector<8x16x4xf32>
    %c0_28 = arith.constant 0 : index
    %c0_29 = arith.constant 0 : index
    %54 = vector.load %arg3[%c0_28, %c0_29] : memref<16x16xf32, #tpu.memory_space<vmem>>, vector<16x16xf32>
    %55 = vector.shape_cast %54 : vector<16x16xf32> to vector<1x16x16xf32>
    %56 = vector.shape_cast %55 : vector<1x16x16xf32> to vector<1x16x16xf32>
    %57 = vector.broadcast %56 : vector<1x16x16xf32> to vector<8x16x16xf32>
    %cst_30 = arith.constant dense<0.000000e+00> : vector<8x16x4xf32>
    %58 = tpu.matmul %57, %53, %cst_30 {dimension_numbers = #tpu.dot_dimension_numbers<[2], [1], [1], [2], [0, 0, 0, 1, 1, 2], [0], [0]>} : vector<8x16x16xf32>, vector<8x16x4xf32>, vector<8x16x4xf32> -> vector<8x16x4xf32>
    %59 = arith.divf %53, %58 : vector<8x16x4xf32>
    %c0_31 = arith.constant 0 : index
    %c0_32 = arith.constant 0 : index
    %60 = vector.load %arg2[%c0_31, %c0_32] : memref<8x16xf32, #tpu.memory_space<vmem>>, vector<8x16xf32>
    %61 = vector.shape_cast %60 : vector<8x16xf32> to vector<8x16x1xf32>
    %62 = vector.broadcast %61 : vector<8x16x1xf32> to vector<8x16x4xf32>
    %63 = arith.mulf %62, %59 : vector<8x16x4xf32>
    %64 = vector.shape_cast %63 : vector<8x16x4xf32> to vector<128x4xf32>
    %c0_33 = arith.constant 0 : index
    %c0_34 = arith.constant 0 : index
    %65 = vector.load %arg13[%c0_33, %c0_34] : memref<4x32xf32, #tpu.memory_space<vmem>>, vector<4x32xf32>
    %cst_35 = arith.constant dense<0.000000e+00> : vector<128x32xf32>
    %66 = tpu.matmul %64, %65, %cst_35 {dimension_numbers = #tpu.dot_dimension_numbers<[1], [0], [0], [1], [0, 0, 1, 1], [], []>} : vector<128x4xf32>, vector<4x32xf32>, vector<128x32xf32> -> vector<128x32xf32>
    %c0_36 = arith.constant 0 : index
    %c0_37 = arith.constant 0 : index
    %67 = vector.load %arg14[%c0_36, %c0_37] : memref<8x32xf32, #tpu.memory_space<vmem>>, vector<8x32xf32>
    %cst_38 = arith.constant dense<0.000000e+00> : vector<128x32xf32>
    %68 = tpu.matmul %36, %67, %cst_38 {dimension_numbers = #tpu.dot_dimension_numbers<[1], [0], [0], [1], [0, 0, 1, 1], [], []>} : vector<128x8xf32>, vector<8x32xf32>, vector<128x32xf32> -> vector<128x32xf32>
    %69 = arith.mulf %66, %68 : vector<128x32xf32>
    %70 = vector.shape_cast %69 : vector<128x32xf32> to vector<8x16x32xf32>
    %cst_39 = arith.constant dense<0.000000e+00> : vector<8x32xf32>
    %71 = vector.multi_reduction <add>, %70, %cst_39 [1] : vector<8x16x32xf32> to vector<8x32xf32>
    %cst_40 = arith.constant 0.166666672 : f32
    %72 = vector.broadcast %cst_40 : f32 to vector<8x32xf32>
    %73 = arith.mulf %71, %72 : vector<8x32xf32>
    %c0_41 = arith.constant 0 : index
    %c0_42 = arith.constant 0 : index
    %74 = vector.load %arg15[%c0_41, %c0_42] : memref<8x32xf32, #tpu.memory_space<vmem>>, vector<8x32xf32>
    tpu.vector_store %arg15[%c0_41, %c0_42], %73 {strides = array<i32>} : memref<8x32xf32, #tpu.memory_space<vmem>>, vector<8x32xf32>,
    return
  }
  func.func @transform_0(%arg0: i32) -> (i32, i32, i32) {
    %c0_i32 = arith.constant 0 : i32
    %c0_i32_0 = arith.constant 0 : i32
    %c0_i32_1 = arith.constant 0 : i32
    return %arg0, %c0_i32, %c0_i32_0 : i32, i32, i32
  }
  func.func @transform_1(%arg0: i32) -> (i32, i32) {
    %c0_i32 = arith.constant 0 : i32
    %c0_i32_0 = arith.constant 0 : i32
    return %arg0, %c0_i32 : i32, i32
  }
  func.func @transform_2(%arg0: i32) -> (i32, i32) {
    %c0_i32 = arith.constant 0 : i32
    %c0_i32_0 = arith.constant 0 : i32
    %c0_i32_1 = arith.constant 0 : i32
    return %c0_i32, %c0_i32_0 : i32, i32
  }
  func.func @transform_3(%arg0: i32) -> (i32, i32) {
    %c0_i32 = arith.constant 0 : i32
    %c0_i32_0 = arith.constant 0 : i32
    %c0_i32_1 = arith.constant 0 : i32
    return %c0_i32, %c0_i32_0 : i32, i32
  }
  func.func @transform_4(%arg0: i32) -> (i32, i32) {
    %c0_i32 = arith.constant 0 : i32
    %c0_i32_0 = arith.constant 0 : i32
    %c0_i32_1 = arith.constant 0 : i32
    return %c0_i32, %c0_i32_0 : i32, i32
  }
  func.func @transform_5(%arg0: i32) -> (i32, i32) {
    %c0_i32 = arith.constant 0 : i32
    %c0_i32_0 = arith.constant 0 : i32
    %c0_i32_1 = arith.constant 0 : i32
    return %c0_i32, %c0_i32_0 : i32, i32
  }
  func.func @transform_6(%arg0: i32) -> (i32, i32) {
    %c0_i32 = arith.constant 0 : i32
    %c0_i32_0 = arith.constant 0 : i32
    %c0_i32_1 = arith.constant 0 : i32
    return %c0_i32, %c0_i32_0 : i32, i32
  }
  func.func @transform_7(%arg0: i32) -> (i32, i32) {
    %c0_i32 = arith.constant 0 : i32
    %c0_i32_0 = arith.constant 0 : i32
    %c0_i32_1 = arith.constant 0 : i32
    return %c0_i32, %c0_i32_0 : i32, i32
  }
  func.func @transform_8(%arg0: i32) -> (i32, i32) {
    %c0_i32 = arith.constant 0 : i32
    %c0_i32_0 = arith.constant 0 : i32
    %c0_i32_1 = arith.constant 0 : i32
    return %c0_i32, %c0_i32_0 : i32, i32
  }
  func.func @transform_9(%arg0: i32) -> (i32, i32) {
    %c0_i32 = arith.constant 0 : i32
    %c0_i32_0 = arith.constant 0 : i32
    %c0_i32_1 = arith.constant 0 : i32
    return %c0_i32, %c0_i32_0 : i32, i32
  }
  func.func @transform_10(%arg0: i32) -> (i32, i32) {
    %c0_i32 = arith.constant 0 : i32
    %c0_i32_0 = arith.constant 0 : i32
    %c0_i32_1 = arith.constant 0 : i32
    return %c0_i32, %c0_i32_0 : i32, i32
  }
  func.func @transform_11(%arg0: i32) -> (i32, i32) {
    %c0_i32 = arith.constant 0 : i32
    %c0_i32_0 = arith.constant 0 : i32
    %c0_i32_1 = arith.constant 0 : i32
    return %c0_i32, %c0_i32_0 : i32, i32
  }
  func.func @transform_12(%arg0: i32) -> (i32, i32) {
    %c0_i32 = arith.constant 0 : i32
    %c0_i32_0 = arith.constant 0 : i32
    %c0_i32_1 = arith.constant 0 : i32
    return %c0_i32, %c0_i32_0 : i32, i32
  }
  func.func @transform_13(%arg0: i32) -> (i32, i32) {
    %c0_i32 = arith.constant 0 : i32
    %c0_i32_0 = arith.constant 0 : i32
    %c0_i32_1 = arith.constant 0 : i32
    return %c0_i32, %c0_i32_0 : i32, i32
  }
  func.func @transform_14(%arg0: i32) -> (i32, i32) {
    %c0_i32 = arith.constant 0 : i32
    %c0_i32_0 = arith.constant 0 : i32
    return %arg0, %c0_i32 : i32, i32
  }
}

</mosaic_0001>

<llo_original>
// kernel: tpu_custom_call.1
$region0: #{tpu_custom_call.1}
  #allocation0 [shape = 'u32[]', space=smem, size = 0x4, offset = 0x4, fixed_abs, tag = 'smem constant byte address 0x4 - core index']
  #allocation1 [shape = 'u32[144,128]{1,0:T(1,128)}', space=vmem, size = 0x12000, scoped, tag = 'internal scratch']
  %s0 = inlined_call_operand.hbm [shape: f32[16,16,32], index: 0, kind: input, shape index: {}]
  %s1 = inlined_call_operand.vmem [shape: f32[16,16], index: 1, kind: input, shape index: {}]
  %s2 = inlined_call_operand.vmem [shape: f32[16,16], index: 2, kind: input, shape index: {}]
  %s3 = inlined_call_operand.vmem [shape: f32[16,8], index: 3, kind: input, shape index: {}]
  %s4 = inlined_call_operand.vmem [shape: f32[1,32], index: 4, kind: input, shape index: {}]
  %s5 = inlined_call_operand.vmem [shape: f32[1,32], index: 5, kind: input, shape index: {}]
  %s6 = inlined_call_operand.vmem [shape: f32[32,8], index: 6, kind: input, shape index: {}]
  %s7 = inlined_call_operand.vmem [shape: f32[1,8], index: 7, kind: input, shape index: {}]
  %s8 = inlined_call_operand.vmem [shape: f32[8,4], index: 8, kind: input, shape index: {}]
  %s9 = inlined_call_operand.vmem [shape: f32[1,4], index: 9, kind: input, shape index: {}]
  %s10 = inlined_call_operand.vmem [shape: f32[4,4], index: 10, kind: input, shape index: {}]
  %s11 = inlined_call_operand.vmem [shape: f32[1,4], index: 11, kind: input, shape index: {}]
  %s12 = inlined_call_operand.vmem [shape: f32[4,32], index: 12, kind: input, shape index: {}]
  %s13 = inlined_call_operand.vmem [shape: f32[8,32], index: 13, kind: input, shape index: {}]
  %s14 = inlined_call_operand.hbm [shape: f32[16,32], index: 14, kind: output, shape index: {}]
  %s15 = sld [smem:[#allocation0]]
  $region93: #{tpu_custom_call.1} parent=0
    _
  %s17 = ssub.s32 1, %s15
  %s18 = scalar_select 0, %s17, %s15
  $region1: #{tpu_custom_call.1} parent=0
    #allocation2 [shape = 'u8[131072]{0}', space=vmem, size = 0x20000, scoped, tag = 'input window, operand 0']
    #allocation3 [shape = 's32[2]{0}', space=sflag, size = 0x8, scoped, tag = 'scoped memory for tpu_custom_call.1']
    #allocation4 [shape = 's32[2]{0}', space=sflag, size = 0x8, scoped, tag = 'scoped memory for tpu_custom_call.1']
    #allocation5 [shape = 'u8[8192]{0}', space=vmem, size = 0x2000, scoped, tag = 'output window, operand 0']
    %19 = vsyncpa [#allocation3], 0
    %s20 = scalar_lea.sflag [#allocation3], 1
    %21 = vsyncpa %s20, 0
    %22 = vsyncpa [#allocation4], 0
    %s23 = scalar_lea.sflag [#allocation4], 1
    %24 = vsyncpa %s23, 0
    loop: start=0, step=1, limit=4
    $region2: #{tpu_custom_call.1} parent=1 // loop_pre_header
      _
    $region3: #{tpu_custom_call.1} parent=1 // loop_header
      %s26 = sphi 0, %s30
      %p27 = scmp.ge.s32.totalorder %s26, 4
      %s36 = sphi 0, %s38
      %s39 = sphi 0, %s36
      %s40 = sphi 0, %s39
      %s56 = sphi 0, %s40
      %s62 = sphi 0, %s64
      %s65 = sphi 0, %s62
      %s66 = sphi 0, %s65
      %s82 = sphi 0, %s66
      %s86 = sphi 0, %s86
      %s88 = sphi 0, %s86
      %s89 = sphi 0, %s88
      %s103 = sphi 0, %s89
      %s107 = sphi 0, %s107
      %s109 = sphi 0, %s107
      %s110 = sphi 0, %s109
      %s124 = sphi 0, %s110
      %s128 = sphi 0, %s128
      %s130 = sphi 0, %s128
      %s131 = sphi 0, %s130
      %s145 = sphi 0, %s131
      %s149 = sphi 0, %s149
      %s151 = sphi 0, %s149
      %s152 = sphi 0, %s151
      %s166 = sphi 0, %s152
      %s170 = sphi 0, %s170
      %s172 = sphi 0, %s170
      %s173 = sphi 0, %s172
      %s187 = sphi 0, %s173
      %s191 = sphi 0, %s191
      %s193 = sphi 0, %s191
      %s194 = sphi 0, %s193
      %s208 = sphi 0, %s194
      %s212 = sphi 0, %s212
      %s214 = sphi 0, %s212
      %s215 = sphi 0, %s214
      %s229 = sphi 0, %s215
      %s233 = sphi 0, %s233
      %s235 = sphi 0, %s233
      %s236 = sphi 0, %s235
      %s250 = sphi 0, %s236
      %s254 = sphi 0, %s254
      %s256 = sphi 0, %s254
      %s257 = sphi 0, %s256
      %s271 = sphi 0, %s257
      %s275 = sphi 0, %s275
      %s277 = sphi 0, %s275
      %s278 = sphi 0, %s277
      %s292 = sphi 0, %s278
      %s296 = sphi 0, %s296
      %s298 = sphi 0, %s296
      %s299 = sphi 0, %s298
      %s313 = sphi 0, %s299
      %s317 = sphi 0, %s317
      %s319 = sphi 0, %s317
      %s320 = sphi 0, %s319
      %s334 = sphi 0, %s320
      %s340 = sphi 0, %s342
      %s343 = sphi 0, %s340
      %s344 = sphi 0, %s343
      %s360 = sphi 0, %s344
    $region4: #{tpu_custom_call.1} parent=1 // loop_header_branch
      %29 = sbr.rel (%p27) target = $region8
    $region5: #{tpu_custom_call.1} parent=1 // loop_body
      %s31 = ssub.s32 %s26, 1
      %s32 = ssub.s32 %s26, 2
      %s33 = sadd.s32 %s26, 1
      %s34 = ssub.s32 %s26, %s33
      %p35 = scmp.eq.s32.totalorder %s34, 0
      %s37 = sadd.s32 %s36, 1
      %s38 = scalar_select %p35, %s36, %s37
      %p41 = pneg %p35
      %p42 = scmp.eq.s32.totalorder %s26, 1
      %p43 = por %p41, %p42
      %p44 = scmp.ne.s32.totalorder %s36, %s39
      %p45 = scmp.eq.s32.totalorder %s26, 0
      %p46 = por %p44, %p45
      %p47 = scmp.ne.s32.totalorder %s36, %s39
      %p48 = scmp.eq.s32.totalorder %s31, 1
      %p49 = por %p47, %p48
      %p50 = scmp.ne.s32.totalorder %s39, %s40
      %p51 = scmp.eq.s32.totalorder %s31, 0
      %p52 = por %p50, %p51
      %p53 = scmp.ne.s32.totalorder %s39, %s40
      %p54 = scmp.eq.s32.totalorder %s32, 1
      %p55 = por %p53, %p54
      %p57 = scmp.ne.s32.totalorder %s40, %s56
      %p58 = scmp.eq.s32.totalorder %s32, 0
      %p59 = por %p57, %p58
      %s60 = ssub.s32 %s26, %s33
      %p61 = scmp.eq.s32.totalorder %s60, 0
      %s63 = sadd.s32 %s62, 1
      %s64 = scalar_select %p61, %s62, %s63
      %p67 = pneg %p61
      %p68 = scmp.eq.s32.totalorder %s26, 1
      %p69 = por %p67, %p68
      %p70 = scmp.ne.s32.totalorder %s62, %s65
      %p71 = scmp.eq.s32.totalorder %s26, 0
      %p72 = por %p70, %p71
      %p73 = scmp.ne.s32.totalorder %s62, %s65
      %p74 = scmp.eq.s32.totalorder %s31, 1
      %p75 = por %p73, %p74
      %p76 = scmp.ne.s32.totalorder %s65, %s66
      %p77 = scmp.eq.s32.totalorder %s31, 0
      %p78 = por %p76, %p77
      %p79 = scmp.ne.s32.totalorder %s65, %s66
      %p80 = scmp.eq.s32.totalorder %s32, 1
      %p81 = por %p79, %p80
      %p83 = scmp.ne.s32.totalorder %s66, %s82
      %p84 = scmp.eq.s32.totalorder %s32, 0
      %p85 = por %p83, %p84
      %s87 = sadd.s32 %s86, 1
      %p90 = scmp.eq.s32.totalorder %s26, 1
      %p91 = scmp.ne.s32.totalorder %s86, %s88
      %p92 = scmp.eq.s32.totalorder %s26, 0
      %p93 = por %p91, %p92
      %p94 = scmp.ne.s32.totalorder %s86, %s88
      %p95 = scmp.eq.s32.totalorder %s31, 1
      %p96 = por %p94, %p95
      %p97 = scmp.ne.s32.totalorder %s88, %s89
      %p98 = scmp.eq.s32.totalorder %s31, 0
      %p99 = por %p97, %p98
      %p100 = scmp.ne.s32.totalorder %s88, %s89
      %p101 = scmp.eq.s32.totalorder %s32, 1
      %p102 = por %p100, %p101
      %p104 = scmp.ne.s32.totalorder %s89, %s103
      %p105 = scmp.eq.s32.totalorder %s32, 0
      %p106 = por %p104, %p105
      %s108 = sadd.s32 %s107, 1
      %p111 = scmp.eq.s32.totalorder %s26, 1
      %p112 = scmp.ne.s32.totalorder %s107, %s109
      %p113 = scmp.eq.s32.totalorder %s26, 0
      %p114 = por %p112, %p113
      %p115 = scmp.ne.s32.totalorder %s107, %s109
      %p116 = scmp.eq.s32.totalorder %s31, 1
      %p117 = por %p115, %p116
      %p118 = scmp.ne.s32.totalorder %s109, %s110
      %p119 = scmp.eq.s32.totalorder %s31, 0
      %p120 = por %p118, %p119
      %p121 = scmp.ne.s32.totalorder %s109, %s110
      %p122 = scmp.eq.s32.totalorder %s32, 1
      %p123 = por %p121, %p122
      %p125 = scmp.ne.s32.totalorder %s110, %s124
      %p126 = scmp.eq.s32.totalorder %s32, 0
      %p127 = por %p125, %p126
      %s129 = sadd.s32 %s128, 1
      %p132 = scmp.eq.s32.totalorder %s26, 1
      %p133 = scmp.ne.s32.totalorder %s128, %s130
      %p134 = scmp.eq.s32.totalorder %s26, 0
      %p135 = por %p133, %p134
      %p136 = scmp.ne.s32.totalorder %s128, %s130
      %p137 = scmp.eq.s32.totalorder %s31, 1
      %p138 = por %p136, %p137
      %p139 = scmp.ne.s32.totalorder %s130, %s131
      %p140 = scmp.eq.s32.totalorder %s31, 0
      %p141 = por %p139, %p140
      %p142 = scmp.ne.s32.totalorder %s130, %s131
      %p143 = scmp.eq.s32.totalorder %s32, 1
      %p144 = por %p142, %p143
      %p146 = scmp.ne.s32.totalorder %s131, %s145
      %p147 = scmp.eq.s32.totalorder %s32, 0
      %p148 = por %p146, %p147
      %s150 = sadd.s32 %s149, 1
      %p153 = scmp.eq.s32.totalorder %s26, 1
      %p154 = scmp.ne.s32.totalorder %s149, %s151
      %p155 = scmp.eq.s32.totalorder %s26, 0
      %p156 = por %p154, %p155
      %p157 = scmp.ne.s32.totalorder %s149, %s151
      %p158 = scmp.eq.s32.totalorder %s31, 1
      %p159 = por %p157, %p158
      %p160 = scmp.ne.s32.totalorder %s151, %s152
      %p161 = scmp.eq.s32.totalorder %s31, 0
      %p162 = por %p160, %p161
      %p163 = scmp.ne.s32.totalorder %s151, %s152
      %p164 = scmp.eq.s32.totalorder %s32, 1
      %p165 = por %p163, %p164
      %p167 = scmp.ne.s32.totalorder %s152, %s166
      %p168 = scmp.eq.s32.totalorder %s32, 0
      %p169 = por %p167, %p168
      %s171 = sadd.s32 %s170, 1
      %p174 = scmp.eq.s32.totalorder %s26, 1
      %p175 = scmp.ne.s32.totalorder %s170, %s172
      %p176 = scmp.eq.s32.totalorder %s26, 0
      %p177 = por %p175, %p176
      %p178 = scmp.ne.s32.totalorder %s170, %s172
      %p179 = scmp.eq.s32.totalorder %s31, 1
      %p180 = por %p178, %p179
      %p181 = scmp.ne.s32.totalorder %s172, %s173
      %p182 = scmp.eq.s32.totalorder %s31, 0
      %p183 = por %p181, %p182
      %p184 = scmp.ne.s32.totalorder %s172, %s173
      %p185 = scmp.eq.s32.totalorder %s32, 1
      %p186 = por %p184, %p185
      %p188 = scmp.ne.s32.totalorder %s173, %s187
      %p189 = scmp.eq.s32.totalorder %s32, 0
      %p190 = por %p188, %p189
      %s192 = sadd.s32 %s191, 1
      %p195 = scmp.eq.s32.totalorder %s26, 1
      %p196 = scmp.ne.s32.totalorder %s191, %s193
      %p197 = scmp.eq.s32.totalorder %s26, 0
      %p198 = por %p196, %p197
      %p199 = scmp.ne.s32.totalorder %s191, %s193
      %p200 = scmp.eq.s32.totalorder %s31, 1
      %p201 = por %p199, %p200
      %p202 = scmp.ne.s32.totalorder %s193, %s194
      %p203 = scmp.eq.s32.totalorder %s31, 0
      %p204 = por %p202, %p203
      %p205 = scmp.ne.s32.totalorder %s193, %s194
      %p206 = scmp.eq.s32.totalorder %s32, 1
      %p207 = por %p205, %p206
      %p209 = scmp.ne.s32.totalorder %s194, %s208
      %p210 = scmp.eq.s32.totalorder %s32, 0
      %p211 = por %p209, %p210
      %s213 = sadd.s32 %s212, 1
      %p216 = scmp.eq.s32.totalorder %s26, 1
      %p217 = scmp.ne.s32.totalorder %s212, %s214
      %p218 = scmp.eq.s32.totalorder %s26, 0
      %p219 = por %p217, %p218
      %p220 = scmp.ne.s32.totalorder %s212, %s214
      %p221 = scmp.eq.s32.totalorder %s31, 1
      %p222 = por %p220, %p221
      %p223 = scmp.ne.s32.totalorder %s214, %s215
      %p224 = scmp.eq.s32.totalorder %s31, 0
      %p225 = por %p223, %p224
      %p226 = scmp.ne.s32.totalorder %s214, %s215
      %p227 = scmp.eq.s32.totalorder %s32, 1
      %p228 = por %p226, %p227
      %p230 = scmp.ne.s32.totalorder %s215, %s229
      %p231 = scmp.eq.s32.totalorder %s32, 0
      %p232 = por %p230, %p231
      %s234 = sadd.s32 %s233, 1
      %p237 = scmp.eq.s32.totalorder %s26, 1
      %p238 = scmp.ne.s32.totalorder %s233, %s235
      %p239 = scmp.eq.s32.totalorder %s26, 0
      %p240 = por %p238, %p239
      %p241 = scmp.ne.s32.totalorder %s233, %s235
      %p242 = scmp.eq.s32.totalorder %s31, 1
      %p243 = por %p241, %p242
      %p244 = scmp.ne.s32.totalorder %s235, %s236
      %p245 = scmp.eq.s32.totalorder %s31, 0
      %p246 = por %p244, %p245
      %p247 = scmp.ne.s32.totalorder %s235, %s236
      %p248 = scmp.eq.s32.totalorder %s32, 1
      %p249 = por %p247, %p248
      %p251 = scmp.ne.s32.totalorder %s236, %s250
      %p252 = scmp.eq.s32.totalorder %s32, 0
      %p253 = por %p251, %p252
      %s255 = sadd.s32 %s254, 1
      %p258 = scmp.eq.s32.totalorder %s26, 1
      %p259 = scmp.ne.s32.totalorder %s254, %s256
      %p260 = scmp.eq.s32.totalorder %s26, 0
      %p261 = por %p259, %p260
      %p262 = scmp.ne.s32.totalorder %s254, %s256
      %p263 = scmp.eq.s32.totalorder %s31, 1
      %p264 = por %p262, %p263
      %p265 = scmp.ne.s32.totalorder %s256, %s257
      %p266 = scmp.eq.s32.totalorder %s31, 0
      %p267 = por %p265, %p266
      %p268 = scmp.ne.s32.totalorder %s256, %s257
      %p269 = scmp.eq.s32.totalorder %s32, 1
      %p270 = por %p268, %p269
      %p272 = scmp.ne.s32.totalorder %s257, %s271
      %p273 = scmp.eq.s32.totalorder %s32, 0
      %p274 = por %p272, %p273
      %s276 = sadd.s32 %s275, 1
      %p279 = scmp.eq.s32.totalorder %s26, 1
      %p280 = scmp.ne.s32.totalorder %s275, %s277
      %p281 = scmp.eq.s32.totalorder %s26, 0
      %p282 = por %p280, %p281
      %p283 = scmp.ne.s32.totalorder %s275, %s277
      %p284 = scmp.eq.s32.totalorder %s31, 1
      %p285 = por %p283, %p284
      %p286 = scmp.ne.s32.totalorder %s277, %s278
      %p287 = scmp.eq.s32.totalorder %s31, 0
      %p288 = por %p286, %p287
      %p289 = scmp.ne.s32.totalorder %s277, %s278
      %p290 = scmp.eq.s32.totalorder %s32, 1
      %p291 = por %p289, %p290
      %p293 = scmp.ne.s32.totalorder %s278, %s292
      %p294 = scmp.eq.s32.totalorder %s32, 0
      %p295 = por %p293, %p294
      %s297 = sadd.s32 %s296, 1
      %p300 = scmp.eq.s32.totalorder %s26, 1
      %p301 = scmp.ne.s32.totalorder %s296, %s298
      %p302 = scmp.eq.s32.totalorder %s26, 0
      %p303 = por %p301, %p302
      %p304 = scmp.ne.s32.totalorder %s296, %s298
      %p305 = scmp.eq.s32.totalorder %s31, 1
      %p306 = por %p304, %p305
      %p307 = scmp.ne.s32.totalorder %s298, %s299
      %p308 = scmp.eq.s32.totalorder %s31, 0
      %p309 = por %p307, %p308
      %p310 = scmp.ne.s32.totalorder %s298, %s299
      %p311 = scmp.eq.s32.totalorder %s32, 1
      %p312 = por %p310, %p311
      %p314 = scmp.ne.s32.totalorder %s299, %s313
      %p315 = scmp.eq.s32.totalorder %s32, 0
      %p316 = por %p314, %p315
      %s318 = sadd.s32 %s317, 1
      %p321 = scmp.eq.s32.totalorder %s26, 1
      %p322 = scmp.ne.s32.totalorder %s317, %s319
      %p323 = scmp.eq.s32.totalorder %s26, 0
      %p324 = por %p322, %p323
      %p325 = scmp.ne.s32.totalorder %s317, %s319
      %p326 = scmp.eq.s32.totalorder %s31, 1
      %p327 = por %p325, %p326
      %p328 = scmp.ne.s32.totalorder %s319, %s320
      %p329 = scmp.eq.s32.totalorder %s31, 0
      %p330 = por %p328, %p329
      %p331 = scmp.ne.s32.totalorder %s319, %s320
      %p332 = scmp.eq.s32.totalorder %s32, 1
      %p333 = por %p331, %p332
      %p335 = scmp.ne.s32.totalorder %s320, %s334
      %p336 = scmp.eq.s32.totalorder %s32, 0
      %p337 = por %p335, %p336
      %s338 = ssub.s32 %s26, %s33
      %p339 = scmp.eq.s32.totalorder %s338, 0
      %s341 = sadd.s32 %s340, 1
      %s342 = scalar_select %p339, %s340, %s341
      %p345 = pneg %p339
      %p346 = scmp.eq.s32.totalorder %s26, 1
      %p347 = por %p345, %p346
      %p348 = scmp.ne.s32.totalorder %s340, %s343
      %p349 = scmp.eq.s32.totalorder %s26, 0
      %p350 = por %p348, %p349
      %p351 = scmp.ne.s32.totalorder %s340, %s343
      %p352 = scmp.eq.s32.totalorder %s31, 1
      %p353 = por %p351, %p352
      %p354 = scmp.ne.s32.totalorder %s343, %s344
      %p355 = scmp.eq.s32.totalorder %s31, 0
      %p356 = por %p354, %p355
      %p357 = scmp.ne.s32.totalorder %s343, %s344
      %p358 = scmp.eq.s32.totalorder %s32, 1
      %p359 = por %p357, %p358
      %p361 = scmp.ne.s32.totalorder %s344, %s360
      %p362 = scmp.eq.s32.totalorder %s32, 0
      %p363 = por %p361, %p362
      %p364 = scmp.le.s32.totalorder 1, %s26
      %p365 = scmp.lt.s32.totalorder %s26, 3
      %p366 = pnand %p364, %p365
      %p367 = pneg %p366
      // Predicated region
      $region9: #{tpu_custom_call.1} parent=5 // pred_check
        _
      $region10: #{tpu_custom_call.1} parent=5 // pred_check_branch
        %369 = sbr.rel (%p366) target = $region12
      $region11: #{tpu_custom_call.1} parent=5 // pred_region
        %s370 = ssub.s32 %s26, 1
        // Predicated region
        $region13: #{tpu_custom_call.1} parent=11 // pred_check
          %p371 = pneg %p99
        $region14: #{tpu_custom_call.1} parent=11 // pred_check_branch
          %373 = sbr.rel (%p371) target = $region16
        $region15: #{tpu_custom_call.1} parent=11 // pred_region
          _
        $region16: #{tpu_custom_call.1} parent=11 // pred_fallthru
          _
        // Predicated region
        $region17: #{tpu_custom_call.1} parent=11 // pred_check
          %p374 = pneg %p120
        $region18: #{tpu_custom_call.1} parent=11 // pred_check_branch
          %376 = sbr.rel (%p374) target = $region20
        $region19: #{tpu_custom_call.1} parent=11 // pred_region
          _
        $region20: #{tpu_custom_call.1} parent=11 // pred_fallthru
          _
        // Predicated region
        $region21: #{tpu_custom_call.1} parent=11 // pred_check
          %p377 = pneg %p141
        $region22: #{tpu_custom_call.1} parent=11 // pred_check_branch
          %379 = sbr.rel (%p377) target = $region24
        $region23: #{tpu_custom_call.1} parent=11 // pred_region
          _
        $region24: #{tpu_custom_call.1} parent=11 // pred_fallthru
          _
        // Predicated region
        $region25: #{tpu_custom_call.1} parent=11 // pred_check
          %p380 = pneg %p162
        $region26: #{tpu_custom_call.1} parent=11 // pred_check_branch
          %382 = sbr.rel (%p380) target = $region28
        $region27: #{tpu_custom_call.1} parent=11 // pred_region
          _
        $region28: #{tpu_custom_call.1} parent=11 // pred_fallthru
          _
        // Predicated region
        $region29: #{tpu_custom_call.1} parent=11 // pred_check
          %p383 = pneg %p183
        $region30: #{tpu_custom_call.1} parent=11 // pred_check_branch
          %385 = sbr.rel (%p383) target = $region32
        $region31: #{tpu_custom_call.1} parent=11 // pred_region
          _
        $region32: #{tpu_custom_call.1} parent=11 // pred_fallthru
          _
        // Predicated region
        $region33: #{tpu_custom_call.1} parent=11 // pred_check
          %p386 = pneg %p204
        $region34: #{tpu_custom_call.1} parent=11 // pred_check_branch
          %388 = sbr.rel (%p386) target = $region36
        $region35: #{tpu_custom_call.1} parent=11 // pred_region
          _
        $region36: #{tpu_custom_call.1} parent=11 // pred_fallthru
          _
        // Predicated region
        $region37: #{tpu_custom_call.1} parent=11 // pred_check
          %p389 = pneg %p225
        $region38: #{tpu_custom_call.1} parent=11 // pred_check_branch
          %391 = sbr.rel (%p389) target = $region40
        $region39: #{tpu_custom_call.1} parent=11 // pred_region
          _
        $region40: #{tpu_custom_call.1} parent=11 // pred_fallthru
          _
        // Predicated region
        $region41: #{tpu_custom_call.1} parent=11 // pred_check
          %p392 = pneg %p246
        $region42: #{tpu_custom_call.1} parent=11 // pred_check_branch
          %394 = sbr.rel (%p392) target = $region44
        $region43: #{tpu_custom_call.1} parent=11 // pred_region
          _
        $region44: #{tpu_custom_call.1} parent=11 // pred_fallthru
          _
        // Predicated region
        $region45: #{tpu_custom_call.1} parent=11 // pred_check
          %p395 = pneg %p267
        $region46: #{tpu_custom_call.1} parent=11 // pred_check_branch
          %397 = sbr.rel (%p395) target = $region48
        $region47: #{tpu_custom_call.1} parent=11 // pred_region
          _
        $region48: #{tpu_custom_call.1} parent=11 // pred_fallthru
          _
        // Predicated region
        $region49: #{tpu_custom_call.1} parent=11 // pred_check
          %p398 = pneg %p288
        $region50: #{tpu_custom_call.1} parent=11 // pred_check_branch
          %400 = sbr.rel (%p398) target = $region52
        $region51: #{tpu_custom_call.1} parent=11 // pred_region
          _
        $region52: #{tpu_custom_call.1} parent=11 // pred_fallthru
          _
        // Predicated region
        $region53: #{tpu_custom_call.1} parent=11 // pred_check
          %p401 = pneg %p309
        $region54: #{tpu_custom_call.1} parent=11 // pred_check_branch
          %403 = sbr.rel (%p401) target = $region56
        $region55: #{tpu_custom_call.1} parent=11 // pred_region
          _
        $region56: #{tpu_custom_call.1} parent=11 // pred_fallthru
          _
        // Predicated region
        $region57: #{tpu_custom_call.1} parent=11 // pred_check
          %p404 = pneg %p330
        $region58: #{tpu_custom_call.1} parent=11 // pred_check_branch
          %406 = sbr.rel (%p404) target = $region60
        $region59: #{tpu_custom_call.1} parent=11 // pred_region
          _
        $region60: #{tpu_custom_call.1} parent=11 // pred_fallthru
          _
      $region12: #{tpu_custom_call.1} parent=5 // pred_fallthru
        _
      %p407 = scmp.lt.s32.totalorder %s26, 2
      // Predicated region
      $region61: #{tpu_custom_call.1} parent=5 // pred_check
        %p408 = pneg %p407
      $region62: #{tpu_custom_call.1} parent=5 // pred_check_branch
        %410 = sbr.rel (%p408) target = $region64
      $region63: #{tpu_custom_call.1} parent=5 // pred_region
        // Predicated region
        $region65: #{tpu_custom_call.1} parent=63 // pred_check
          %p411 = pneg %p46
        $region66: #{tpu_custom_call.1} parent=63 // pred_check_branch
          %413 = sbr.rel (%p411) target = $region68
        $region67: #{tpu_custom_call.1} parent=63 // pred_region
          %s414 = sand.u32 %s36, 1
          %s415 = scalar_lea.sflag [#allocation3], %s414
          %s416 = sand.u32 %s36, 1
          %s417 = smul.addr %s416, 128
          %s418 = scalar_lea.vmem [#allocation2], %s417
          %s419 = smul.u32 8, %s26
          %s421 = ssub.s32 2048, 2048
          %422 = vsyncadd %s415, %s421
          %s423 = smul.addr %s419, 2
          %s424 = smul.addr %s423, 128
          %s425 = scalar_lea.hbm %s0, %s424
          %s426 = sshll.u32 %s418, 4
          %s427 = int_to_ptr.vmem [resolvable:$true] %s426
          %432 = dma.hbm_to_vmem [thread:$0]  %s425, 2048, %s427, %s415, 128, 128, 8
        $region68: #{tpu_custom_call.1} parent=63 // pred_fallthru
          _
        // Predicated region
        $region69: #{tpu_custom_call.1} parent=63 // pred_check
          %p433 = pneg %p72
        $region70: #{tpu_custom_call.1} parent=63 // pred_check_branch
          %435 = sbr.rel (%p433) target = $region72
        $region71: #{tpu_custom_call.1} parent=63 // pred_region
          %p436 = scmp.lt.s32.totalorder %s26, 1
          %s437 = scalar_select %p436, %s26, 1
          %s438 = smul.addr %s437, 8
          %s439 = scalar_lea.vmem %s1, %s438
        $region72: #{tpu_custom_call.1} parent=63 // pred_fallthru
          _
      $region64: #{tpu_custom_call.1} parent=5 // pred_fallthru
        _
      %p440 = scmp.le.s32.totalorder 1, %s26
      %p441 = scmp.lt.s32.totalorder %s26, 3
      %p442 = pnand %p440, %p441
      %p443 = pneg %p442
      // Predicated region
      $region73: #{tpu_custom_call.1} parent=5 // pred_check
        _
      $region74: #{tpu_custom_call.1} parent=5 // pred_check_branch
        %445 = sbr.rel (%p442) target = $region76
      $region75: #{tpu_custom_call.1} parent=5 // pred_region
        %s446 = ssub.s32 %s26, 1
        %s447 = sand.u32 %s39, 1
        %s448 = scalar_lea.sflag [#allocation3], %s447
        %s449 = sand.u32 %s39, 1
        %s450 = smul.addr %s449, 128
        %s451 = scalar_lea.vmem [#allocation2], %s450
        // Predicated region
        $region77: #{tpu_custom_call.1} parent=75 // pred_check
          %p452 = pneg %p52
        $region78: #{tpu_custom_call.1} parent=75 // pred_check_branch
          %454 = sbr.rel (%p452) target = $region80
        $region79: #{tpu_custom_call.1} parent=75 // pred_region
          %455 = dma.done %s448, 2048
        $region80: #{tpu_custom_call.1} parent=75 // pred_fallthru
          _
        %s456 = sand.u32 %s39, 1
        %s457 = scalar_lea.sflag [#allocation3], %s456
        %s458 = sand.u32 %s39, 1
        %s459 = smul.addr %s458, 128
        %s460 = scalar_lea.vmem [#allocation2], %s459
        %p461 = pneg %p52
        %p462 = pneg %p49
        %p463 = scmp.lt.s32.totalorder %s31, 1
        %s464 = scalar_select %p463, %s31, 1
        %s465 = smul.addr %s464, 8
        %s466 = scalar_lea.vmem %s1, %s465
        %p467 = pneg %p78
        %p468 = pneg %p75
        %p469 = pneg %p99
        %p470 = pneg %p96
        %p471 = pneg %p120
        %p472 = pneg %p117
        %p473 = pneg %p141
        %p474 = pneg %p138
        %p475 = pneg %p162
        %p476 = pneg %p159
        %p477 = pneg %p183
        %p478 = pneg %p180
        %p479 = pneg %p204
        %p480 = pneg %p201
        %p481 = pneg %p225
        %p482 = pneg %p222
        %p483 = pneg %p246
        %p484 = pneg %p243
        %p485 = pneg %p267
        %p486 = pneg %p264
        %p487 = pneg %p288
        %p488 = pneg %p285
        %p489 = pneg %p309
        %p490 = pneg %p306
        %p491 = pneg %p330
        %p492 = pneg %p327
        %p493 = pneg %p356
        %p494 = pneg %p353
        %s495 = sand.u32 %s343, 1
        %s496 = scalar_lea.sflag [#allocation4], %s495
        %s497 = sand.u32 %s343, 1
        %s498 = smul.addr %s497, 8
        %s499 = scalar_lea.vmem [#allocation5], %s498
        %s500 = smul.u32 8, %s31
        %p501 = scmp.lt.s32.totalorder %s31, 1
        %s502 = scalar_select %p501, %s31, 1
        %s503 = smul.addr %s502, 8
        %s504 = scalar_lea.vmem %s1, %s503
        %v505 = vld [vmem:[%s451] sm:$0xff]
        %v506 = vld [vmem:[%s451 + $0x8] sm:$0xff]
        %v507 = vld [vmem:[%s451 + $0x10] sm:$0xff]
        %v508 = vld [vmem:[%s451 + $0x18] sm:$0xff]
        %v509 = vld [vmem:[%s451 + $0x20] sm:$0xff]
        %v510 = vld [vmem:[%s451 + $0x28] sm:$0xff]
        %v511 = vld [vmem:[%s451 + $0x30] sm:$0xff]
        %v512 = vld [vmem:[%s451 + $0x38] sm:$0xff]
        %v513 = vld [vmem:[%s451 + $0x40] sm:$0xff]
        %v514 = vld [vmem:[%s451 + $0x48] sm:$0xff]
        %v515 = vld [vmem:[%s451 + $0x50] sm:$0xff]
        %v516 = vld [vmem:[%s451 + $0x58] sm:$0xff]
        %v517 = vld [vmem:[%s451 + $0x60] sm:$0xff]
        %v518 = vld [vmem:[%s451 + $0x68] sm:$0xff]
        %v519 = vld [vmem:[%s451 + $0x70] sm:$0xff]
        %v520 = vld [vmem:[%s451 + $0x78] sm:$0xff]
        %vm521 = vcmask 261120
        %v522 = vsel %vm521, %v505, 0.0
        %523 = vadd.xlane.f32.xlu0 %v522
        %v524 = vpop.xlane.xlu0 %523
        %v525 = vsel %vm521, %v506, 0.0
        %526 = vadd.xlane.f32.xlu0 %v525
        %v527 = vpop.xlane.xlu0 %526
        %v528 = vsel %vm521, %v507, 0.0
        %529 = vadd.xlane.f32.xlu0 %v528
        %v530 = vpop.xlane.xlu0 %529
        %v531 = vsel %vm521, %v508, 0.0
        %532 = vadd.xlane.f32.xlu0 %v531
        %v533 = vpop.xlane.xlu0 %532
        %v534 = vsel %vm521, %v509, 0.0
        %535 = vadd.xlane.f32.xlu0 %v534
        %v536 = vpop.xlane.xlu0 %535
        %v537 = vsel %vm521, %v510, 0.0
        %538 = vadd.xlane.f32.xlu0 %v537
        %v539 = vpop.xlane.xlu0 %538
        %v540 = vsel %vm521, %v511, 0.0
        %541 = vadd.xlane.f32.xlu0 %v540
        %v542 = vpop.xlane.xlu0 %541
        %v543 = vsel %vm521, %v512, 0.0
        %544 = vadd.xlane.f32.xlu0 %v543
        %v545 = vpop.xlane.xlu0 %544
        %v546 = vsel %vm521, %v513, 0.0
        %547 = vadd.xlane.f32.xlu0 %v546
        %v548 = vpop.xlane.xlu0 %547
        %v549 = vsel %vm521, %v514, 0.0
        %550 = vadd.xlane.f32.xlu0 %v549
        %v551 = vpop.xlane.xlu0 %550
        %v552 = vsel %vm521, %v515, 0.0
        %553 = vadd.xlane.f32.xlu0 %v552
        %v554 = vpop.xlane.xlu0 %553
        %v555 = vsel %vm521, %v516, 0.0
        %556 = vadd.xlane.f32.xlu0 %v555
        %v557 = vpop.xlane.xlu0 %556
        %v558 = vsel %vm521, %v517, 0.0
        %559 = vadd.xlane.f32.xlu0 %v558
        %v560 = vpop.xlane.xlu0 %559
        %v561 = vsel %vm521, %v518, 0.0
        %562 = vadd.xlane.f32.xlu0 %v561
        %v563 = vpop.xlane.xlu0 %562
        %v564 = vsel %vm521, %v519, 0.0
        %565 = vadd.xlane.f32.xlu0 %v564
        %v566 = vpop.xlane.xlu0 %565
        %v567 = vsel %vm521, %v520, 0.0
        %568 = vadd.xlane.f32.xlu0 %v567
        %v569 = vpop.xlane.xlu0 %568
        %v570 = vrcp.pop 32.0
        %v571 = vmul.f32 %v524, %v570
        %v572 = vmul.f32 %v527, %v570
        %v573 = vmul.f32 %v530, %v570
        %v574 = vmul.f32 %v533, %v570
        %v575 = vmul.f32 %v536, %v570
        %v576 = vmul.f32 %v539, %v570
        %v577 = vmul.f32 %v542, %v570
        %v578 = vmul.f32 %v545, %v570
        %v579 = vmul.f32 %v548, %v570
        %v580 = vmul.f32 %v551, %v570
        %v581 = vmul.f32 %v554, %v570
        %v582 = vmul.f32 %v557, %v570
        %v583 = vmul.f32 %v560, %v570
        %v584 = vmul.f32 %v563, %v570
        %v585 = vmul.f32 %v566, %v570
        %v586 = vmul.f32 %v569, %v570
        %v587 = vsub.f32 %v505, %v571
        %v588 = vsub.f32 %v506, %v572
        %v589 = vsub.f32 %v507, %v573
        %v590 = vsub.f32 %v508, %v574
        %v591 = vsub.f32 %v509, %v575
        %v592 = vsub.f32 %v510, %v576
        %v593 = vsub.f32 %v511, %v577
        %v594 = vsub.f32 %v512, %v578
        %v595 = vsub.f32 %v513, %v579
        %v596 = vsub.f32 %v514, %v580
        %v597 = vsub.f32 %v515, %v581
        %v598 = vsub.f32 %v516, %v582
        %v599 = vsub.f32 %v517, %v583
        %v600 = vsub.f32 %v518, %v584
        %v601 = vsub.f32 %v519, %v585
        %v602 = vsub.f32 %v520, %v586
        %v603 = vmul.f32 %v587, %v587
        %v604 = vmul.f32 %v588, %v588
        %v605 = vmul.f32 %v589, %v589
        %v606 = vmul.f32 %v590, %v590
        %v607 = vmul.f32 %v591, %v591
        %v608 = vmul.f32 %v592, %v592
        %v609 = vmul.f32 %v593, %v593
        %v610 = vmul.f32 %v594, %v594
        %v611 = vmul.f32 %v595, %v595
        %v612 = vmul.f32 %v596, %v596
        %v613 = vmul.f32 %v597, %v597
        %v614 = vmul.f32 %v598, %v598
        %v615 = vmul.f32 %v599, %v599
        %v616 = vmul.f32 %v600, %v600
        %v617 = vmul.f32 %v601, %v601
        %v618 = vmul.f32 %v602, %v602
        %v619 = vsel %vm521, %v603, 0.0
        %620 = vadd.xlane.f32.xlu0 %v619
        %v621 = vpop.xlane.xlu0 %620
        %v622 = vsel %vm521, %v604, 0.0
        %623 = vadd.xlane.f32.xlu0 %v622
        %v624 = vpop.xlane.xlu0 %623
        %v625 = vsel %vm521, %v605, 0.0
        %626 = vadd.xlane.f32.xlu0 %v625
        %v627 = vpop.xlane.xlu0 %626
        %v628 = vsel %vm521, %v606, 0.0
        %629 = vadd.xlane.f32.xlu0 %v628
        %v630 = vpop.xlane.xlu0 %629
        %v631 = vsel %vm521, %v607, 0.0
        %632 = vadd.xlane.f32.xlu0 %v631
        %v633 = vpop.xlane.xlu0 %632
        %v634 = vsel %vm521, %v608, 0.0
        %635 = vadd.xlane.f32.xlu0 %v634
        %v636 = vpop.xlane.xlu0 %635
        %v637 = vsel %vm521, %v609, 0.0
        %638 = vadd.xlane.f32.xlu0 %v637
        %v639 = vpop.xlane.xlu0 %638
        %v640 = vsel %vm521, %v610, 0.0
        %641 = vadd.xlane.f32.xlu0 %v640
        %v642 = vpop.xlane.xlu0 %641
        %v643 = vsel %vm521, %v611, 0.0
        %644 = vadd.xlane.f32.xlu0 %v643
        %v645 = vpop.xlane.xlu0 %644
        %v646 = vsel %vm521, %v612, 0.0
        %647 = vadd.xlane.f32.xlu0 %v646
        %v648 = vpop.xlane.xlu0 %647
        %v649 = vsel %vm521, %v613, 0.0
        %650 = vadd.xlane.f32.xlu0 %v649
        %v651 = vpop.xlane.xlu0 %650
        %v652 = vsel %vm521, %v614, 0.0
        %653 = vadd.xlane.f32.xlu0 %v652
        %v654 = vpop.xlane.xlu0 %653
        %v655 = vsel %vm521, %v615, 0.0
        %656 = vadd.xlane.f32.xlu0 %v655
        %v657 = vpop.xlane.xlu0 %656
        %v658 = vsel %vm521, %v616, 0.0
        %659 = vadd.xlane.f32.xlu0 %v658
        %v660 = vpop.xlane.xlu0 %659
        %v661 = vsel %vm521, %v617, 0.0
        %662 = vadd.xlane.f32.xlu0 %v661
        %v663 = vpop.xlane.xlu0 %662
        %v664 = vsel %vm521, %v618, 0.0
        %665 = vadd.xlane.f32.xlu0 %v664
        %v666 = vpop.xlane.xlu0 %665
        %v667 = vmul.f32 %v621, %v570
        %v668 = vmul.f32 %v624, %v570
        %v669 = vmul.f32 %v627, %v570
        %v670 = vmul.f32 %v630, %v570
        %v671 = vmul.f32 %v633, %v570
        %v672 = vmul.f32 %v636, %v570
        %v673 = vmul.f32 %v639, %v570
        %v674 = vmul.f32 %v642, %v570
        %v675 = vmul.f32 %v645, %v570
        %v676 = vmul.f32 %v648, %v570
        %v677 = vmul.f32 %v651, %v570
        %v678 = vmul.f32 %v654, %v570
        %v679 = vmul.f32 %v657, %v570
        %v680 = vmul.f32 %v660, %v570
        %v681 = vmul.f32 %v663, %v570
        %v682 = vmul.f32 %v666, %v570
        %v683 = vadd.f32 %v667, 1e-05
        %v684 = vadd.f32 %v668, 1e-05
        %v685 = vadd.f32 %v669, 1e-05
        %v686 = vadd.f32 %v670, 1e-05
        %v687 = vadd.f32 %v671, 1e-05
        %v688 = vadd.f32 %v672, 1e-05
        %v689 = vadd.f32 %v673, 1e-05
        %v690 = vadd.f32 %v674, 1e-05
        %v691 = vadd.f32 %v675, 1e-05
        %v692 = vadd.f32 %v676, 1e-05
        %v693 = vadd.f32 %v677, 1e-05
        %v694 = vadd.f32 %v678, 1e-05
        %v695 = vadd.f32 %v679, 1e-05
        %v696 = vadd.f32 %v680, 1e-05
        %v697 = vadd.f32 %v681, 1e-05
        %v698 = vadd.f32 %v682, 1e-05
        %v699 = vrsqrt.pop %v683
        %v700 = vrsqrt.pop %v684
        %v701 = vrsqrt.pop %v685
        %v702 = vrsqrt.pop %v686
        %v703 = vrsqrt.pop %v687
        %v704 = vrsqrt.pop %v688
        %v705 = vrsqrt.pop %v689
        %v706 = vrsqrt.pop %v690
        %v707 = vrsqrt.pop %v691
        %v708 = vrsqrt.pop %v692
        %v709 = vrsqrt.pop %v693
        %v710 = vrsqrt.pop %v694
        %v711 = vrsqrt.pop %v695
        %v712 = vrsqrt.pop %v696
        %v713 = vrsqrt.pop %v697
        %v714 = vrsqrt.pop %v698
        %v715 = vmul.f32 %v587, %v699
        %v716 = vmul.f32 %v588, %v700
        %v717 = vmul.f32 %v589, %v701
        %v718 = vmul.f32 %v590, %v702
        %v719 = vmul.f32 %v591, %v703
        %v720 = vmul.f32 %v592, %v704
        %v721 = vmul.f32 %v593, %v705
        %v722 = vmul.f32 %v594, %v706
        %v723 = vmul.f32 %v595, %v707
        %v724 = vmul.f32 %v596, %v708
        %v725 = vmul.f32 %v597, %v709
        %v726 = vmul.f32 %v598, %v710
        %v727 = vmul.f32 %v599, %v711
        %v728 = vmul.f32 %v600, %v712
        %v729 = vmul.f32 %v601, %v713
        %v730 = vmul.f32 %v602, %v714
        %v731 = vld [vmem:[%s4] sm:$0x1]
        %v733 = vlaneseq
        %v734 = vshrl.u32 %v733, 7
        %v735 = vsub.s32 0, %v734
        %v736 = vrot.slane %v731, %v735
        %v738 = vmul.f32 %v715, %v736
        %v739 = vmul.f32 %v716, %v736
        %v740 = vmul.f32 %v717, %v736
        %v741 = vmul.f32 %v718, %v736
        %v742 = vmul.f32 %v719, %v736
        %v743 = vmul.f32 %v720, %v736
        %v744 = vmul.f32 %v721, %v736
        %v745 = vmul.f32 %v722, %v736
        %v746 = vmul.f32 %v723, %v736
        %v747 = vmul.f32 %v724, %v736
        %v748 = vmul.f32 %v725, %v736
        %v749 = vmul.f32 %v726, %v736
        %v750 = vmul.f32 %v727, %v736
        %v751 = vmul.f32 %v728, %v736
        %v752 = vmul.f32 %v729, %v736
        %v753 = vmul.f32 %v730, %v736
        %v754 = vld [vmem:[%s5] sm:$0x1]
        %v756 = vlaneseq
        %v757 = vshrl.u32 %v756, 7
        %v758 = vsub.s32 0, %v757
        %v759 = vrot.slane %v754, %v758
        %v761 = vadd.f32 %v738, %v759
        %v762 = vadd.f32 %v739, %v759
        %v763 = vadd.f32 %v740, %v759
        %v764 = vadd.f32 %v741, %v759
        %v765 = vadd.f32 %v742, %v759
        %v766 = vadd.f32 %v743, %v759
        %v767 = vadd.f32 %v744, %v759
        %v768 = vadd.f32 %v745, %v759
        %v769 = vadd.f32 %v746, %v759
        %v770 = vadd.f32 %v747, %v759
        %v771 = vadd.f32 %v748, %v759
        %v772 = vadd.f32 %v749, %v759
        %v773 = vadd.f32 %v750, %v759
        %v774 = vadd.f32 %v751, %v759
        %v775 = vadd.f32 %v752, %v759
        %v776 = vadd.f32 %v753, %v759
        %v777 = vld [vmem:[%s6] sm:$0xff]
        %v778 = vld [vmem:[%s6 + $0x8] sm:$0xff]
        %v779 = vld [vmem:[%s6 + $0x10] sm:$0xff]
        %v780 = vld [vmem:[%s6 + $0x18] sm:$0xff]
        %v781 = vld [vmem:[%s7] sm:$0x1]
        %v783 = vlaneseq
        %v784 = vshrl.u32 %v783, 7
        %v785 = vsub.s32 0, %v784
        %v786 = vrot.slane %v781, %v785
        %v789 = vsel %vm521, %v761, 0
        %v792 = vsel %vm521, %v762, 0
        %v795 = vsel %vm521, %v763, 0
        %v798 = vsel %vm521, %v764, 0
        %v801 = vsel %vm521, %v765, 0
        %v804 = vsel %vm521, %v766, 0
        %v807 = vsel %vm521, %v767, 0
        %v810 = vsel %vm521, %v768, 0
        %v813 = vsel %vm521, %v769, 0
        %v816 = vsel %vm521, %v770, 0
        %v819 = vsel %vm521, %v771, 0
        %v822 = vsel %vm521, %v772, 0
        %v825 = vsel %vm521, %v773, 0
        %v828 = vsel %vm521, %v774, 0
        %v831 = vsel %vm521, %v775, 0
        %v834 = vsel %vm521, %v776, 0
        %836 = vmatprep.subr.mxu0 0.0
        %837 = vmatpush1.msra.mxu0 %v777
        %838 = vmatprep.subr.mxu0 0.0
        %839 = vmatpush1.msra.mxu0 %v778
        %840 = vmatprep.subr.mxu0 0.0
        %841 = vmatpush1.msra.mxu0 %v779
        %842 = vmatprep.subr.mxu0 0.0
        %843 = vmatpush1.msra.mxu0 %v780
        %844 = vmatprep.subr.mxu0 0.0
        %845 = vmatpush1.msra.mxu0 0.0
        %846 = vmatprep.subr.mxu0 0.0
        %847 = vmatpush1.msra.mxu0 0.0
        %848 = vmatprep.subr.mxu0 0.0
        %849 = vmatpush1.msra.mxu0 0.0
        %850 = vmatprep.subr.mxu0 0.0
        %851 = vmatpush1.msra.mxu0 0.0
        %852 = vmatprep.subr.mxu0 0.0
        %853 = vmatpush1.msra.mxu0 0.0
        %854 = vmatprep.subr.mxu0 0.0
        %855 = vmatpush1.msra.mxu0 0.0
        %856 = vmatprep.subr.mxu0 0.0
        %857 = vmatpush1.msra.mxu0 0.0
        %858 = vmatprep.subr.mxu0 0.0
        %859 = vmatpush1.msra.mxu0 0.0
        %860 = vmatprep.subr.mxu0 0.0
        %861 = vmatpush1.msra.mxu0 0.0
        %862 = vmatprep.subr.mxu0 0.0
        %863 = vmatpush1.msra.mxu0 0.0
        %864 = vmatprep.subr.mxu0 0.0
        %865 = vmatpush1.msra.mxu0 0.0
        %866 = vmatprep.subr.mxu0 0.0
        %867 = vmatpush1.msra.mxu0 0.0
        %868 = vmatprep.subr.mxu0 0.0
        %869 = vmatpush1.msra.mxu0 0.0
        %870 = vmatprep.subr.mxu0 0.0
        %871 = vmatpush1.msra.mxu0 0.0
        %872 = vmatprep.subr.mxu0 0.0
        %873 = vmatpush1.msra.mxu0 0.0
        %874 = vmatprep.subr.mxu0 0.0
        %875 = vmatpush1.msra.mxu0 0.0
        %876 = vmatprep.subr.mxu0 0.0
        %877 = vmatpush1.msra.mxu0 0.0
        %878 = vmatprep.subr.mxu0 0.0
        %879 = vmatpush1.msra.mxu0 0.0
        %880 = vmatprep.subr.mxu0 0.0
        %881 = vmatpush1.msra.mxu0 0.0
        %882 = vmatprep.subr.mxu0 0.0
        %883 = vmatpush1.msra.mxu0 0.0
        %884 = vmatprep.subr.mxu0 0.0
        %885 = vmatpush1.msra.mxu0 0.0
        %886 = vmatprep.subr.mxu0 0.0
        %887 = vmatpush1.msra.mxu0 0.0
        %888 = vmatprep.subr.mxu0 0.0
        %889 = vmatpush1.msra.mxu0 0.0
        %890 = vmatprep.subr.mxu0 0.0
        %891 = vmatpush1.msra.mxu0 0.0
        %892 = vmatprep.subr.mxu0 0.0
        %893 = vmatpush1.msra.mxu0 0.0
        %894 = vmatprep.subr.mxu0 0.0
        %895 = vmatpush1.msra.mxu0 0.0
        %896 = vmatprep.subr.mxu0 0.0
        %897 = vmatpush1.msra.mxu0 0.0
        %898 = vmatprep.subr.mxu0 0.0
        %899 = vmatpush1.msra.mxu0 0.0
        %900 = vmatprep.mubr.f32.mxu0 0.0
        %901 = vmatmul.mubr.f32.gmra.mrb[0].mxu0 %v789
        %v902 = vpop.f32.mrb[0].mxu0
        %v903 = vadd.f32 %v786, %v902
        %v904 = vpop.f32.mrb[0].mxu0
        %905 = vmatprep.mubr.f32.mxu0 0.0
        %906 = vmatmul.mubr.f32.gmra.mrb[0].mxu0 %v792
        %v907 = vpop.f32.mrb[0].mxu0
        %v908 = vadd.f32 %v786, %v907
        %v909 = vpop.f32.mrb[0].mxu0
        %910 = vmatprep.mubr.f32.mxu0 0.0
        %911 = vmatmul.mubr.f32.gmra.mrb[0].mxu0 %v795
        %v912 = vpop.f32.mrb[0].mxu0
        %v913 = vadd.f32 %v786, %v912
        %v914 = vpop.f32.mrb[0].mxu0
        %915 = vmatprep.mubr.f32.mxu0 0.0
        %916 = vmatmul.mubr.f32.gmra.mrb[0].mxu0 %v798
        %v917 = vpop.f32.mrb[0].mxu0
        %v918 = vadd.f32 %v786, %v917
        %v919 = vpop.f32.mrb[0].mxu0
        %920 = vmatprep.mubr.f32.mxu0 0.0
        %921 = vmatmul.mubr.f32.gmra.mrb[0].mxu0 %v801
        %v922 = vpop.f32.mrb[0].mxu0
        %v923 = vadd.f32 %v786, %v922
        %v924 = vpop.f32.mrb[0].mxu0
        %925 = vmatprep.mubr.f32.mxu0 0.0
        %926 = vmatmul.mubr.f32.gmra.mrb[0].mxu0 %v804
        %v927 = vpop.f32.mrb[0].mxu0
        %v928 = vadd.f32 %v786, %v927
        %v929 = vpop.f32.mrb[0].mxu0
        %930 = vmatprep.mubr.f32.mxu0 0.0
        %931 = vmatmul.mubr.f32.gmra.mrb[0].mxu0 %v807
        %v932 = vpop.f32.mrb[0].mxu0
        %v933 = vadd.f32 %v786, %v932
        %v934 = vpop.f32.mrb[0].mxu0
        %935 = vmatprep.mubr.f32.mxu0 0.0
        %936 = vmatmul.mubr.f32.gmra.mrb[0].mxu0 %v810
        %v937 = vpop.f32.mrb[0].mxu0
        %v938 = vadd.f32 %v786, %v937
        %v939 = vpop.f32.mrb[0].mxu0
        %940 = vmatprep.mubr.f32.mxu0 0.0
        %941 = vmatmul.mubr.f32.gmra.mrb[0].mxu0 %v813
        %v942 = vpop.f32.mrb[0].mxu0
        %v943 = vadd.f32 %v786, %v942
        %v944 = vpop.f32.mrb[0].mxu0
        %945 = vmatprep.mubr.f32.mxu0 0.0
        %946 = vmatmul.mubr.f32.gmra.mrb[0].mxu0 %v816
        %v947 = vpop.f32.mrb[0].mxu0
        %v948 = vadd.f32 %v786, %v947
        %v949 = vpop.f32.mrb[0].mxu0
        %950 = vmatprep.mubr.f32.mxu0 0.0
        %951 = vmatmul.mubr.f32.gmra.mrb[0].mxu0 %v819
        %v952 = vpop.f32.mrb[0].mxu0
        %v953 = vadd.f32 %v786, %v952
        %v954 = vpop.f32.mrb[0].mxu0
        %955 = vmatprep.mubr.f32.mxu0 0.0
        %956 = vmatmul.mubr.f32.gmra.mrb[0].mxu0 %v822
        %v957 = vpop.f32.mrb[0].mxu0
        %v958 = vadd.f32 %v786, %v957
        %v959 = vpop.f32.mrb[0].mxu0
        %960 = vmatprep.mubr.f32.mxu0 0.0
        %961 = vmatmul.mubr.f32.gmra.mrb[0].mxu0 %v825
        %v962 = vpop.f32.mrb[0].mxu0
        %v963 = vadd.f32 %v786, %v962
        %v964 = vpop.f32.mrb[0].mxu0
        %965 = vmatprep.mubr.f32.mxu0 0.0
        %966 = vmatmul.mubr.f32.gmra.mrb[0].mxu0 %v828
        %v967 = vpop.f32.mrb[0].mxu0
        %v968 = vadd.f32 %v786, %v967
        %v969 = vpop.f32.mrb[0].mxu0
        %970 = vmatprep.mubr.f32.mxu0 0.0
        %971 = vmatmul.mubr.f32.gmra.mrb[0].mxu0 %v831
        %v972 = vpop.f32.mrb[0].mxu0
        %v973 = vadd.f32 %v786, %v972
        %v974 = vpop.f32.mrb[0].mxu0
        %975 = vmatprep.mubr.f32.mxu0 0.0
        %976 = vmatmul.mubr.f32.gmra.mrb[0].mxu0 %v834
        %v977 = vpop.f32.mrb[0].mxu0
        %v978 = vadd.f32 %v786, %v977
        %v979 = vpop.f32.mrb[0].mxu0
        %980 = vdwg.mxu0
        %v981 = vld [vmem:[%s3] sm:$0xff]
        %v982 = vld [vmem:[%s3 + $0x8] sm:$0xff]
        %v983 = vadd.f32 %v903, %v981
        %v984 = vadd.f32 %v908, %v982
        %v985 = vadd.f32 %v913, %v981
        %v986 = vadd.f32 %v918, %v982
        %v987 = vadd.f32 %v923, %v981
        %v988 = vadd.f32 %v928, %v982
        %v989 = vadd.f32 %v933, %v981
        %v990 = vadd.f32 %v938, %v982
        %v991 = vadd.f32 %v943, %v981
        %v992 = vadd.f32 %v948, %v982
        %v993 = vadd.f32 %v953, %v981
        %v994 = vadd.f32 %v958, %v982
        %v995 = vadd.f32 %v963, %v981
        %v996 = vadd.f32 %v968, %v982
        %v997 = vadd.f32 %v973, %v981
        %v998 = vadd.f32 %v978, %v982
        %v999 = vld [vmem:[%s8] sm:$0xff]
        %v1000 = vld [vmem:[%s9] sm:$0x1]
        %v1002 = vlaneseq
        %v1003 = vshrl.u32 %v1002, 7
        %v1004 = vsub.s32 0, %v1003
        %v1005 = vrot.slane %v1000, %v1004
        %vm1007 = vcmask 64512
        %v1009 = vsel %vm1007, %v983, 0
        %v1012 = vsel %vm1007, %v984, 0
        %v1015 = vsel %vm1007, %v985, 0
        %v1018 = vsel %vm1007, %v986, 0
        %v1021 = vsel %vm1007, %v987, 0
        %v1024 = vsel %vm1007, %v988, 0
        %v1027 = vsel %vm1007, %v989, 0
        %v1030 = vsel %vm1007, %v990, 0
        %v1033 = vsel %vm1007, %v991, 0
        %v1036 = vsel %vm1007, %v992, 0
        %v1039 = vsel %vm1007, %v993, 0
        %v1042 = vsel %vm1007, %v994, 0
        %v1045 = vsel %vm1007, %v995, 0
        %v1048 = vsel %vm1007, %v996, 0
        %v1051 = vsel %vm1007, %v997, 0
        %v1054 = vsel %vm1007, %v998, 0
        %1056 = vmatprep.subr.mxu0 0.0
        %1057 = vmatpush1.msra.mxu0 %v999
        %1058 = vmatprep.subr.mxu0 0.0
        %1059 = vmatpush1.msra.mxu0 0.0
        %1060 = vmatprep.subr.mxu0 0.0
        %1061 = vmatpush1.msra.mxu0 0.0
        %1062 = vmatprep.subr.mxu0 0.0
        %1063 = vmatpush1.msra.mxu0 0.0
        %1064 = vmatprep.subr.mxu0 0.0
        %1065 = vmatpush1.msra.mxu0 0.0
        %1066 = vmatprep.subr.mxu0 0.0
        %1067 = vmatpush1.msra.mxu0 0.0
        %1068 = vmatprep.subr.mxu0 0.0
        %1069 = vmatpush1.msra.mxu0 0.0
        %1070 = vmatprep.subr.mxu0 0.0
        %1071 = vmatpush1.msra.mxu0 0.0
        %1072 = vmatprep.subr.mxu0 0.0
        %1073 = vmatpush1.msra.mxu0 0.0
        %1074 = vmatprep.subr.mxu0 0.0
        %1075 = vmatpush1.msra.mxu0 0.0
        %1076 = vmatprep.subr.mxu0 0.0
        %1077 = vmatpush1.msra.mxu0 0.0
        %1078 = vmatprep.subr.mxu0 0.0
        %1079 = vmatpush1.msra.mxu0 0.0
        %1080 = vmatprep.subr.mxu0 0.0
        %1081 = vmatpush1.msra.mxu0 0.0
        %1082 = vmatprep.subr.mxu0 0.0
        %1083 = vmatpush1.msra.mxu0 0.0
        %1084 = vmatprep.subr.mxu0 0.0
        %1085 = vmatpush1.msra.mxu0 0.0
        %1086 = vmatprep.subr.mxu0 0.0
        %1087 = vmatpush1.msra.mxu0 0.0
        %1088 = vmatprep.subr.mxu0 0.0
        %1089 = vmatpush1.msra.mxu0 0.0
        %1090 = vmatprep.subr.mxu0 0.0
        %1091 = vmatpush1.msra.mxu0 0.0
        %1092 = vmatprep.subr.mxu0 0.0
        %1093 = vmatpush1.msra.mxu0 0.0
        %1094 = vmatprep.subr.mxu0 0.0
        %1095 = vmatpush1.msra.mxu0 0.0
        %1096 = vmatprep.subr.mxu0 0.0
        %1097 = vmatpush1.msra.mxu0 0.0
        %1098 = vmatprep.subr.mxu0 0.0
        %1099 = vmatpush1.msra.mxu0 0.0
        %1100 = vmatprep.subr.mxu0 0.0
        %1101 = vmatpush1.msra.mxu0 0.0
        %1102 = vmatprep.subr.mxu0 0.0
        %1103 = vmatpush1.msra.mxu0 0.0
        %1104 = vmatprep.subr.mxu0 0.0
        %1105 = vmatpush1.msra.mxu0 0.0
        %1106 = vmatprep.subr.mxu0 0.0
        %1107 = vmatpush1.msra.mxu0 0.0
        %1108 = vmatprep.subr.mxu0 0.0
        %1109 = vmatpush1.msra.mxu0 0.0
        %1110 = vmatprep.subr.mxu0 0.0
        %1111 = vmatpush1.msra.mxu0 0.0
        %1112 = vmatprep.subr.mxu0 0.0
        %1113 = vmatpush1.msra.mxu0 0.0
        %1114 = vmatprep.subr.mxu0 0.0
        %1115 = vmatpush1.msra.mxu0 0.0
        %1116 = vmatprep.subr.mxu0 0.0
        %1117 = vmatpush1.msra.mxu0 0.0
        %1118 = vmatprep.subr.mxu0 0.0
        %1119 = vmatpush1.msra.mxu0 0.0
        %1120 = vmatprep.mubr.f32.mxu0 0.0
        %1121 = vmatmul.mubr.f32.gmra.mrb[0].mxu0 %v1009
        %v1122 = vpop.f32.mrb[0].mxu0
        %v1123 = vadd.f32 %v1005, %v1122
        %v1124 = vpop.f32.mrb[0].mxu0
        %1125 = vmatprep.mubr.f32.mxu0 0.0
        %1126 = vmatmul.mubr.f32.gmra.mrb[0].mxu0 %v1012
        %v1127 = vpop.f32.mrb[0].mxu0
        %v1128 = vadd.f32 %v1005, %v1127
        %v1129 = vpop.f32.mrb[0].mxu0
        %1130 = vmatprep.mubr.f32.mxu0 0.0
        %1131 = vmatmul.mubr.f32.gmra.mrb[0].mxu0 %v1015
        %v1132 = vpop.f32.mrb[0].mxu0
        %v1133 = vadd.f32 %v1005, %v1132
        %v1134 = vpop.f32.mrb[0].mxu0
        %1135 = vmatprep.mubr.f32.mxu0 0.0
        %1136 = vmatmul.mubr.f32.gmra.mrb[0].mxu0 %v1018
        %v1137 = vpop.f32.mrb[0].mxu0
        %v1138 = vadd.f32 %v1005, %v1137
        %v1139 = vpop.f32.mrb[0].mxu0
        %1140 = vmatprep.mubr.f32.mxu0 0.0
        %1141 = vmatmul.mubr.f32.gmra.mrb[0].mxu0 %v1021
        %v1142 = vpop.f32.mrb[0].mxu0
        %v1143 = vadd.f32 %v1005, %v1142
        %v1144 = vpop.f32.mrb[0].mxu0
        %1145 = vmatprep.mubr.f32.mxu0 0.0
        %1146 = vmatmul.mubr.f32.gmra.mrb[0].mxu0 %v1024
        %v1147 = vpop.f32.mrb[0].mxu0
        %v1148 = vadd.f32 %v1005, %v1147
        %v1149 = vpop.f32.mrb[0].mxu0
        %1150 = vmatprep.mubr.f32.mxu0 0.0
        %1151 = vmatmul.mubr.f32.gmra.mrb[0].mxu0 %v1027
        %v1152 = vpop.f32.mrb[0].mxu0
        %v1153 = vadd.f32 %v1005, %v1152
        %v1154 = vpop.f32.mrb[0].mxu0
        %1155 = vmatprep.mubr.f32.mxu0 0.0
        %1156 = vmatmul.mubr.f32.gmra.mrb[0].mxu0 %v1030
        %v1157 = vpop.f32.mrb[0].mxu0
        %v1158 = vadd.f32 %v1005, %v1157
        %v1159 = vpop.f32.mrb[0].mxu0
        %1160 = vmatprep.mubr.f32.mxu0 0.0
        %1161 = vmatmul.mubr.f32.gmra.mrb[0].mxu0 %v1033
        %v1162 = vpop.f32.mrb[0].mxu0
        %v1163 = vadd.f32 %v1005, %v1162
        %v1164 = vpop.f32.mrb[0].mxu0
        %1165 = vmatprep.mubr.f32.mxu0 0.0
        %1166 = vmatmul.mubr.f32.gmra.mrb[0].mxu0 %v1036
        %v1167 = vpop.f32.mrb[0].mxu0
        %v1168 = vadd.f32 %v1005, %v1167
        %v1169 = vpop.f32.mrb[0].mxu0
        %1170 = vmatprep.mubr.f32.mxu0 0.0
        %1171 = vmatmul.mubr.f32.gmra.mrb[0].mxu0 %v1039
        %v1172 = vpop.f32.mrb[0].mxu0
        %v1173 = vadd.f32 %v1005, %v1172
        %v1174 = vpop.f32.mrb[0].mxu0
        %1175 = vmatprep.mubr.f32.mxu0 0.0
        %1176 = vmatmul.mubr.f32.gmra.mrb[0].mxu0 %v1042
        %v1177 = vpop.f32.mrb[0].mxu0
        %v1178 = vadd.f32 %v1005, %v1177
        %v1179 = vpop.f32.mrb[0].mxu0
        %1180 = vmatprep.mubr.f32.mxu0 0.0
        %1181 = vmatmul.mubr.f32.gmra.mrb[0].mxu0 %v1045
        %v1182 = vpop.f32.mrb[0].mxu0
        %v1183 = vadd.f32 %v1005, %v1182
        %v1184 = vpop.f32.mrb[0].mxu0
        %1185 = vmatprep.mubr.f32.mxu0 0.0
        %1186 = vmatmul.mubr.f32.gmra.mrb[0].mxu0 %v1048
        %v1187 = vpop.f32.mrb[0].mxu0
        %v1188 = vadd.f32 %v1005, %v1187
        %v1189 = vpop.f32.mrb[0].mxu0
        %1190 = vmatprep.mubr.f32.mxu0 0.0
        %1191 = vmatmul.mubr.f32.gmra.mrb[0].mxu0 %v1051
        %v1192 = vpop.f32.mrb[0].mxu0
        %v1193 = vadd.f32 %v1005, %v1192
        %v1194 = vpop.f32.mrb[0].mxu0
        %1195 = vmatprep.mubr.f32.mxu0 0.0
        %1196 = vmatmul.mubr.f32.gmra.mrb[0].mxu0 %v1054
        %v1197 = vpop.f32.mrb[0].mxu0
        %v1198 = vadd.f32 %v1005, %v1197
        %v1199 = vpop.f32.mrb[0].mxu0
        %1200 = vdwg.mxu0
        %v1201 = vtanh.pop %v1123
        %v1202 = vtanh.pop %v1128
        %v1203 = vtanh.pop %v1133
        %v1204 = vtanh.pop %v1138
        %v1205 = vtanh.pop %v1143
        %v1206 = vtanh.pop %v1148
        %v1207 = vtanh.pop %v1153
        %v1208 = vtanh.pop %v1158
        %v1209 = vtanh.pop %v1163
        %v1210 = vtanh.pop %v1168
        %v1211 = vtanh.pop %v1173
        %v1212 = vtanh.pop %v1178
        %v1213 = vtanh.pop %v1183
        %v1214 = vtanh.pop %v1188
        %v1215 = vtanh.pop %v1193
        %v1216 = vtanh.pop %v1198
        %v1217 = vld [vmem:[%s10] sm:$0xf]
        %v1218 = vld [vmem:[%s11] sm:$0x1]
        %v1220 = vlaneseq
        %v1221 = vshrl.u32 %v1220, 7
        %v1222 = vsub.s32 0, %v1221
        %v1223 = vrot.slane %v1218, %v1222
        %vm1225 = vcmask 31744
        %v1227 = vsel %vm1225, %v1201, 0
        %v1230 = vsel %vm1225, %v1202, 0
        %v1233 = vsel %vm1225, %v1203, 0
        %v1236 = vsel %vm1225, %v1204, 0
        %v1239 = vsel %vm1225, %v1205, 0
        %v1242 = vsel %vm1225, %v1206, 0
        %v1245 = vsel %vm1225, %v1207, 0
        %v1248 = vsel %vm1225, %v1208, 0
        %v1251 = vsel %vm1225, %v1209, 0
        %v1254 = vsel %vm1225, %v1210, 0
        %v1257 = vsel %vm1225, %v1211, 0
        %v1260 = vsel %vm1225, %v1212, 0
        %v1263 = vsel %vm1225, %v1213, 0
        %v1266 = vsel %vm1225, %v1214, 0
        %v1269 = vsel %vm1225, %v1215, 0
        %v1272 = vsel %vm1225, %v1216, 0
        %vm1274 = vcmask 1043456
        %v1276 = vsel %vm1274, %v1217, 0
        %1278 = vmatprep.subr.mxu0 0.0
        %1279 = vmatpush1.msra.mxu0 %v1276
        %1280 = vmatprep.subr.mxu0 0.0
        %1281 = vmatpush1.msra.mxu0 0.0
        %1282 = vmatprep.subr.mxu0 0.0
        %1283 = vmatpush1.msra.mxu0 0.0
        %1284 = vmatprep.subr.mxu0 0.0
        %1285 = vmatpush1.msra.mxu0 0.0
        %1286 = vmatprep.subr.mxu0 0.0
        %1287 = vmatpush1.msra.mxu0 0.0
        %1288 = vmatprep.subr.mxu0 0.0
        %1289 = vmatpush1.msra.mxu0 0.0
        %1290 = vmatprep.subr.mxu0 0.0
        %1291 = vmatpush1.msra.mxu0 0.0
        %1292 = vmatprep.subr.mxu0 0.0
        %1293 = vmatpush1.msra.mxu0 0.0
        %1294 = vmatprep.subr.mxu0 0.0
        %1295 = vmatpush1.msra.mxu0 0.0
        %1296 = vmatprep.subr.mxu0 0.0
        %1297 = vmatpush1.msra.mxu0 0.0
        %1298 = vmatprep.subr.mxu0 0.0
        %1299 = vmatpush1.msra.mxu0 0.0
        %1300 = vmatprep.subr.mxu0 0.0
        %1301 = vmatpush1.msra.mxu0 0.0
        %1302 = vmatprep.subr.mxu0 0.0
        %1303 = vmatpush1.msra.mxu0 0.0
        %1304 = vmatprep.subr.mxu0 0.0
        %1305 = vmatpush1.msra.mxu0 0.0
        %1306 = vmatprep.subr.mxu0 0.0
        %1307 = vmatpush1.msra.mxu0 0.0
        %1308 = vmatprep.subr.mxu0 0.0
        %1309 = vmatpush1.msra.mxu0 0.0
        %1310 = vmatprep.subr.mxu0 0.0
        %1311 = vmatpush1.msra.mxu0 0.0
        %1312 = vmatprep.subr.mxu0 0.0
        %1313 = vmatpush1.msra.mxu0 0.0
        %1314 = vmatprep.subr.mxu0 0.0
        %1315 = vmatpush1.msra.mxu0 0.0
        %1316 = vmatprep.subr.mxu0 0.0
        %1317 = vmatpush1.msra.mxu0 0.0
        %1318 = vmatprep.subr.mxu0 0.0
        %1319 = vmatpush1.msra.mxu0 0.0
        %1320 = vmatprep.subr.mxu0 0.0
        %1321 = vmatpush1.msra.mxu0 0.0
        %1322 = vmatprep.subr.mxu0 0.0
        %1323 = vmatpush1.msra.mxu0 0.0
        %1324 = vmatprep.subr.mxu0 0.0
        %1325 = vmatpush1.msra.mxu0 0.0
        %1326 = vmatprep.subr.mxu0 0.0
        %1327 = vmatpush1.msra.mxu0 0.0
        %1328 = vmatprep.subr.mxu0 0.0
        %1329 = vmatpush1.msra.mxu0 0.0
        %1330 = vmatprep.subr.mxu0 0.0
        %1331 = vmatpush1.msra.mxu0 0.0
        %1332 = vmatprep.subr.mxu0 0.0
        %1333 = vmatpush1.msra.mxu0 0.0
        %1334 = vmatprep.subr.mxu0 0.0
        %1335 = vmatpush1.msra.mxu0 0.0
        %1336 = vmatprep.subr.mxu0 0.0
        %1337 = vmatpush1.msra.mxu0 0.0
        %1338 = vmatprep.subr.mxu0 0.0
        %1339 = vmatpush1.msra.mxu0 0.0
        %1340 = vmatprep.subr.mxu0 0.0
        %1341 = vmatpush1.msra.mxu0 0.0
        %1342 = vmatprep.mubr.f32.mxu0 0.0
        %1343 = vmatmul.mubr.f32.gmra.mrb[0].mxu0 %v1227
        %v1344 = vpop.f32.mrb[0].mxu0
        %v1345 = vadd.f32 %v1223, %v1344
        %v1346 = vpop.f32.mrb[0].mxu0
        %1347 = vmatprep.mubr.f32.mxu0 0.0
        %1348 = vmatmul.mubr.f32.gmra.mrb[0].mxu0 %v1230
        %v1349 = vpop.f32.mrb[0].mxu0
        %v1350 = vadd.f32 %v1223, %v1349
        %v1351 = vpop.f32.mrb[0].mxu0
        %1352 = vmatprep.mubr.f32.mxu0 0.0
        %1353 = vmatmul.mubr.f32.gmra.mrb[0].mxu0 %v1233
        %v1354 = vpop.f32.mrb[0].mxu0
        %v1355 = vadd.f32 %v1223, %v1354
        %v1356 = vpop.f32.mrb[0].mxu0
        %1357 = vmatprep.mubr.f32.mxu0 0.0
        %1358 = vmatmul.mubr.f32.gmra.mrb[0].mxu0 %v1236
        %v1359 = vpop.f32.mrb[0].mxu0
        %v1360 = vadd.f32 %v1223, %v1359
        %v1361 = vpop.f32.mrb[0].mxu0
        %1362 = vmatprep.mubr.f32.mxu0 0.0
        %1363 = vmatmul.mubr.f32.gmra.mrb[0].mxu0 %v1239
        %v1364 = vpop.f32.mrb[0].mxu0
        %v1365 = vadd.f32 %v1223, %v1364
        %v1366 = vpop.f32.mrb[0].mxu0
        %1367 = vmatprep.mubr.f32.mxu0 0.0
        %1368 = vmatmul.mubr.f32.gmra.mrb[0].mxu0 %v1242
        %v1369 = vpop.f32.mrb[0].mxu0
        %v1370 = vadd.f32 %v1223, %v1369
        %v1371 = vpop.f32.mrb[0].mxu0
        %1372 = vmatprep.mubr.f32.mxu0 0.0
        %1373 = vmatmul.mubr.f32.gmra.mrb[0].mxu0 %v1245
        %v1374 = vpop.f32.mrb[0].mxu0
        %v1375 = vadd.f32 %v1223, %v1374
        %v1376 = vpop.f32.mrb[0].mxu0
        %1377 = vmatprep.mubr.f32.mxu0 0.0
        %1378 = vmatmul.mubr.f32.gmra.mrb[0].mxu0 %v1248
        %v1379 = vpop.f32.mrb[0].mxu0
        %v1380 = vadd.f32 %v1223, %v1379
        %v1381 = vpop.f32.mrb[0].mxu0
        %1382 = vmatprep.mubr.f32.mxu0 0.0
        %1383 = vmatmul.mubr.f32.gmra.mrb[0].mxu0 %v1251
        %v1384 = vpop.f32.mrb[0].mxu0
        %v1385 = vadd.f32 %v1223, %v1384
        %v1386 = vpop.f32.mrb[0].mxu0
        %1387 = vmatprep.mubr.f32.mxu0 0.0
        %1388 = vmatmul.mubr.f32.gmra.mrb[0].mxu0 %v1254
        %v1389 = vpop.f32.mrb[0].mxu0
        %v1390 = vadd.f32 %v1223, %v1389
        %v1391 = vpop.f32.mrb[0].mxu0
        %1392 = vmatprep.mubr.f32.mxu0 0.0
        %1393 = vmatmul.mubr.f32.gmra.mrb[0].mxu0 %v1257
        %v1394 = vpop.f32.mrb[0].mxu0
        %v1395 = vadd.f32 %v1223, %v1394
        %v1396 = vpop.f32.mrb[0].mxu0
        %1397 = vmatprep.mubr.f32.mxu0 0.0
        %1398 = vmatmul.mubr.f32.gmra.mrb[0].mxu0 %v1260
        %v1399 = vpop.f32.mrb[0].mxu0
        %v1400 = vadd.f32 %v1223, %v1399
        %v1401 = vpop.f32.mrb[0].mxu0
        %1402 = vmatprep.mubr.f32.mxu0 0.0
        %1403 = vmatmul.mubr.f32.gmra.mrb[0].mxu0 %v1263
        %v1404 = vpop.f32.mrb[0].mxu0
        %v1405 = vadd.f32 %v1223, %v1404
        %v1406 = vpop.f32.mrb[0].mxu0
        %1407 = vmatprep.mubr.f32.mxu0 0.0
        %1408 = vmatmul.mubr.f32.gmra.mrb[0].mxu0 %v1266
        %v1409 = vpop.f32.mrb[0].mxu0
        %v1410 = vadd.f32 %v1223, %v1409
        %v1411 = vpop.f32.mrb[0].mxu0
        %1412 = vmatprep.mubr.f32.mxu0 0.0
        %1413 = vmatmul.mubr.f32.gmra.mrb[0].mxu0 %v1269
        %v1414 = vpop.f32.mrb[0].mxu0
        %v1415 = vadd.f32 %v1223, %v1414
        %v1416 = vpop.f32.mrb[0].mxu0
        %1417 = vmatprep.mubr.f32.mxu0 0.0
        %1418 = vmatmul.mubr.f32.gmra.mrb[0].mxu0 %v1272
        %v1419 = vpop.f32.mrb[0].mxu0
        %v1420 = vadd.f32 %v1223, %v1419
        %v1421 = vpop.f32.mrb[0].mxu0
        %1422 = vdwg.mxu0
        %v1423 = vsel %vm1225, %v1345, -inf
        %v1424 = vsel %vm1225, %v1350, -inf
        %v1425 = vmax.f32 %v1423, %v1424
        %v1426 = vrot.slane %v1425, 4
        %v1427 = vmax.f32 %v1425, %v1426
        %v1428 = vrot.slane %v1427, 2
        %v1429 = vmax.f32 %v1427, %v1428
        %v1430 = vrot.slane %v1429, 1
        %v1431 = vmax.f32 %v1429, %v1430
        %v1432 = vsel %vm1225, %v1355, -inf
        %v1433 = vsel %vm1225, %v1360, -inf
        %v1434 = vmax.f32 %v1432, %v1433
        %v1435 = vrot.slane %v1434, 4
        %v1436 = vmax.f32 %v1434, %v1435
        %v1437 = vrot.slane %v1436, 2
        %v1438 = vmax.f32 %v1436, %v1437
        %v1439 = vrot.slane %v1438, 1
        %v1440 = vmax.f32 %v1438, %v1439
        %v1441 = vsel %vm1225, %v1365, -inf
        %v1442 = vsel %vm1225, %v1370, -inf
        %v1443 = vmax.f32 %v1441, %v1442
        %v1444 = vrot.slane %v1443, 4
        %v1445 = vmax.f32 %v1443, %v1444
        %v1446 = vrot.slane %v1445, 2
        %v1447 = vmax.f32 %v1445, %v1446
        %v1448 = vrot.slane %v1447, 1
        %v1449 = vmax.f32 %v1447, %v1448
        %v1450 = vsel %vm1225, %v1375, -inf
        %v1451 = vsel %vm1225, %v1380, -inf
        %v1452 = vmax.f32 %v1450, %v1451
        %v1453 = vrot.slane %v1452, 4
        %v1454 = vmax.f32 %v1452, %v1453
        %v1455 = vrot.slane %v1454, 2
        %v1456 = vmax.f32 %v1454, %v1455
        %v1457 = vrot.slane %v1456, 1
        %v1458 = vmax.f32 %v1456, %v1457
        %v1459 = vsel %vm1225, %v1385, -inf
        %v1460 = vsel %vm1225, %v1390, -inf
        %v1461 = vmax.f32 %v1459, %v1460
        %v1462 = vrot.slane %v1461, 4
        %v1463 = vmax.f32 %v1461, %v1462
        %v1464 = vrot.slane %v1463, 2
        %v1465 = vmax.f32 %v1463, %v1464
        %v1466 = vrot.slane %v1465, 1
        %v1467 = vmax.f32 %v1465, %v1466
        %v1468 = vsel %vm1225, %v1395, -inf
        %v1469 = vsel %vm1225, %v1400, -inf
        %v1470 = vmax.f32 %v1468, %v1469
        %v1471 = vrot.slane %v1470, 4
        %v1472 = vmax.f32 %v1470, %v1471
        %v1473 = vrot.slane %v1472, 2
        %v1474 = vmax.f32 %v1472, %v1473
        %v1475 = vrot.slane %v1474, 1
        %v1476 = vmax.f32 %v1474, %v1475
        %v1477 = vsel %vm1225, %v1405, -inf
        %v1478 = vsel %vm1225, %v1410, -inf
        %v1479 = vmax.f32 %v1477, %v1478
        %v1480 = vrot.slane %v1479, 4
        %v1481 = vmax.f32 %v1479, %v1480
        %v1482 = vrot.slane %v1481, 2
        %v1483 = vmax.f32 %v1481, %v1482
        %v1484 = vrot.slane %v1483, 1
        %v1485 = vmax.f32 %v1483, %v1484
        %v1486 = vsel %vm1225, %v1415, -inf
        %v1487 = vsel %vm1225, %v1420, -inf
        %v1488 = vmax.f32 %v1486, %v1487
        %v1489 = vrot.slane %v1488, 4
        %v1490 = vmax.f32 %v1488, %v1489
        %v1491 = vrot.slane %v1490, 2
        %v1492 = vmax.f32 %v1490, %v1491
        %v1493 = vrot.slane %v1492, 1
        %v1494 = vmax.f32 %v1492, %v1493
        %v1495 = vsub.f32 %v1345, %v1431
        %v1496 = vsub.f32 %v1350, %v1431
        %v1497 = vsub.f32 %v1355, %v1440
        %v1498 = vsub.f32 %v1360, %v1440
        %v1499 = vsub.f32 %v1365, %v1449
        %v1500 = vsub.f32 %v1370, %v1449
        %v1501 = vsub.f32 %v1375, %v1458
        %v1502 = vsub.f32 %v1380, %v1458
        %v1503 = vsub.f32 %v1385, %v1467
        %v1504 = vsub.f32 %v1390, %v1467
        %v1505 = vsub.f32 %v1395, %v1476
        %v1506 = vsub.f32 %v1400, %v1476
        %v1507 = vsub.f32 %v1405, %v1485
        %v1508 = vsub.f32 %v1410, %v1485
        %v1509 = vsub.f32 %v1415, %v1494
        %v1510 = vsub.f32 %v1420, %v1494
        %v1511 = vmul.f32 %v1495, 1.442695
        %v1512 = vpow.pop %v1511
        %v1513 = vmul.f32 %v1496, 1.442695
        %v1514 = vpow.pop %v1513
        %v1515 = vmul.f32 %v1497, 1.442695
        %v1516 = vpow.pop %v1515
        %v1517 = vmul.f32 %v1498, 1.442695
        %v1518 = vpow.pop %v1517
        %v1519 = vmul.f32 %v1499, 1.442695
        %v1520 = vpow.pop %v1519
        %v1521 = vmul.f32 %v1500, 1.442695
        %v1522 = vpow.pop %v1521
        %v1523 = vmul.f32 %v1501, 1.442695
        %v1524 = vpow.pop %v1523
        %v1525 = vmul.f32 %v1502, 1.442695
        %v1526 = vpow.pop %v1525
        %v1527 = vmul.f32 %v1503, 1.442695
        %v1528 = vpow.pop %v1527
        %v1529 = vmul.f32 %v1504, 1.442695
        %v1530 = vpow.pop %v1529
        %v1531 = vmul.f32 %v1505, 1.442695
        %v1532 = vpow.pop %v1531
        %v1533 = vmul.f32 %v1506, 1.442695
        %v1534 = vpow.pop %v1533
        %v1535 = vmul.f32 %v1507, 1.442695
        %v1536 = vpow.pop %v1535
        %v1537 = vmul.f32 %v1508, 1.442695
        %v1538 = vpow.pop %v1537
        %v1539 = vmul.f32 %v1509, 1.442695
        %v1540 = vpow.pop %v1539
        %v1541 = vmul.f32 %v1510, 1.442695
        %v1542 = vpow.pop %v1541
        %v1543 = vld [vmem:[%s2] sm:$0xff]
        %v1544 = vld [vmem:[%s2 + $0x8] sm:$0xff]
        %vm1545 = vcmask 130048
        %v1547 = vsel %vm1545, %v1543, 0
        %v1550 = vsel %vm1545, %v1544, 0
        %1552 = vmatprep.subr.mxu0 0.0
        %1553 = vmatpush1.msra.mxu0 %v1512
        %1554 = vmatprep.subr.mxu0 0.0
        %1555 = vmatpush1.msra.mxu0 %v1514
        %1556 = vmatprep.subr.mxu0 0.0
        %1557 = vmatpush1.msra.mxu0 0.0
        %1558 = vmatprep.subr.mxu0 0.0
        %1559 = vmatpush1.msra.mxu0 0.0
        %1560 = vmatprep.subr.mxu0 0.0
        %1561 = vmatpush1.msra.mxu0 0.0
        %1562 = vmatprep.subr.mxu0 0.0
        %1563 = vmatpush1.msra.mxu0 0.0
        %1564 = vmatprep.subr.mxu0 0.0
        %1565 = vmatpush1.msra.mxu0 0.0
        %1566 = vmatprep.subr.mxu0 0.0
        %1567 = vmatpush1.msra.mxu0 0.0
        %1568 = vmatprep.subr.mxu0 0.0
        %1569 = vmatpush1.msra.mxu0 0.0
        %1570 = vmatprep.subr.mxu0 0.0
        %1571 = vmatpush1.msra.mxu0 0.0
        %1572 = vmatprep.subr.mxu0 0.0
        %1573 = vmatpush1.msra.mxu0 0.0
        %1574 = vmatprep.subr.mxu0 0.0
        %1575 = vmatpush1.msra.mxu0 0.0
        %1576 = vmatprep.subr.mxu0 0.0
        %1577 = vmatpush1.msra.mxu0 0.0
        %1578 = vmatprep.subr.mxu0 0.0
        %1579 = vmatpush1.msra.mxu0 0.0
        %1580 = vmatprep.subr.mxu0 0.0
        %1581 = vmatpush1.msra.mxu0 0.0
        %1582 = vmatprep.subr.mxu0 0.0
        %1583 = vmatpush1.msra.mxu0 0.0
        %1584 = vmatprep.subr.mxu0 0.0
        %1585 = vmatpush1.msra.mxu0 0.0
        %1586 = vmatprep.subr.mxu0 0.0
        %1587 = vmatpush1.msra.mxu0 0.0
        %1588 = vmatprep.subr.mxu0 0.0
        %1589 = vmatpush1.msra.mxu0 0.0
        %1590 = vmatprep.subr.mxu0 0.0
        %1591 = vmatpush1.msra.mxu0 0.0
        %1592 = vmatprep.subr.mxu0 0.0
        %1593 = vmatpush1.msra.mxu0 0.0
        %1594 = vmatprep.subr.mxu0 0.0
        %1595 = vmatpush1.msra.mxu0 0.0
        %1596 = vmatprep.subr.mxu0 0.0
        %1597 = vmatpush1.msra.mxu0 0.0
        %1598 = vmatprep.subr.mxu0 0.0
        %1599 = vmatpush1.msra.mxu0 0.0
        %1600 = vmatprep.subr.mxu0 0.0
        %1601 = vmatpush1.msra.mxu0 0.0
        %1602 = vmatprep.subr.mxu0 0.0
        %1603 = vmatpush1.msra.mxu0 0.0
        %1604 = vmatprep.subr.mxu0 0.0
        %1605 = vmatpush1.msra.mxu0 0.0
        %1606 = vmatprep.subr.mxu0 0.0
        %1607 = vmatpush1.msra.mxu0 0.0
        %1608 = vmatprep.subr.mxu0 0.0
        %1609 = vmatpush1.msra.mxu0 0.0
        %1610 = vmatprep.subr.mxu0 0.0
        %1611 = vmatpush1.msra.mxu0 0.0
        %1612 = vmatprep.subr.mxu0 0.0
        %1613 = vmatpush1.msra.mxu0 0.0
        %1614 = vmatprep.subr.mxu0 0.0
        %1615 = vmatpush1.msra.mxu0 0.0
        %1616 = vmatprep.mubr.f32.mxu0 0.0
        %1617 = vmatmul.mubr.f32.gmra.mrb[0].mxu0 %v1547
        %v1618 = vpop.f32.mrb[0].mxu0
        %v1619 = vadd.f32 0.0, %v1618
        %v1620 = vpop.f32.mrb[0].mxu0
        %1621 = vmatprep.mubr.f32.mxu0 0.0
        %1622 = vmatmul.mubr.f32.gmra.mrb[0].mxu0 %v1550
        %v1623 = vpop.f32.mrb[0].mxu0
        %v1624 = vadd.f32 0.0, %v1623
        %v1625 = vpop.f32.mrb[0].mxu0
        %1626 = vdwg.mxu0
        %1627 = vmatprep.subr.mxu0 0.0
        %1628 = vmatpush1.msra.mxu0 %v1516
        %1629 = vmatprep.subr.mxu0 0.0
        %1630 = vmatpush1.msra.mxu0 %v1518
        %1631 = vmatprep.subr.mxu0 0.0
        %1632 = vmatpush1.msra.mxu0 0.0
        %1633 = vmatprep.subr.mxu0 0.0
        %1634 = vmatpush1.msra.mxu0 0.0
        %1635 = vmatprep.subr.mxu0 0.0
        %1636 = vmatpush1.msra.mxu0 0.0
        %1637 = vmatprep.subr.mxu0 0.0
        %1638 = vmatpush1.msra.mxu0 0.0
        %1639 = vmatprep.subr.mxu0 0.0
        %1640 = vmatpush1.msra.mxu0 0.0
        %1641 = vmatprep.subr.mxu0 0.0
        %1642 = vmatpush1.msra.mxu0 0.0
        %1643 = vmatprep.subr.mxu0 0.0
        %1644 = vmatpush1.msra.mxu0 0.0
        %1645 = vmatprep.subr.mxu0 0.0
        %1646 = vmatpush1.msra.mxu0 0.0
        %1647 = vmatprep.subr.mxu0 0.0
        %1648 = vmatpush1.msra.mxu0 0.0
        %1649 = vmatprep.subr.mxu0 0.0
        %1650 = vmatpush1.msra.mxu0 0.0
        %1651 = vmatprep.subr.mxu0 0.0
        %1652 = vmatpush1.msra.mxu0 0.0
        %1653 = vmatprep.subr.mxu0 0.0
        %1654 = vmatpush1.msra.mxu0 0.0
        %1655 = vmatprep.subr.mxu0 0.0
        %1656 = vmatpush1.msra.mxu0 0.0
        %1657 = vmatprep.subr.mxu0 0.0
        %1658 = vmatpush1.msra.mxu0 0.0
        %1659 = vmatprep.subr.mxu0 0.0
        %1660 = vmatpush1.msra.mxu0 0.0
        %1661 = vmatprep.subr.mxu0 0.0
        %1662 = vmatpush1.msra.mxu0 0.0
        %1663 = vmatprep.subr.mxu0 0.0
        %1664 = vmatpush1.msra.mxu0 0.0
        %1665 = vmatprep.subr.mxu0 0.0
        %1666 = vmatpush1.msra.mxu0 0.0
        %1667 = vmatprep.subr.mxu0 0.0
        %1668 = vmatpush1.msra.mxu0 0.0
        %1669 = vmatprep.subr.mxu0 0.0
        %1670 = vmatpush1.msra.mxu0 0.0
        %1671 = vmatprep.subr.mxu0 0.0
        %1672 = vmatpush1.msra.mxu0 0.0
        %1673 = vmatprep.subr.mxu0 0.0
        %1674 = vmatpush1.msra.mxu0 0.0
        %1675 = vmatprep.subr.mxu0 0.0
        %1676 = vmatpush1.msra.mxu0 0.0
        %1677 = vmatprep.subr.mxu0 0.0
        %1678 = vmatpush1.msra.mxu0 0.0
        %1679 = vmatprep.subr.mxu0 0.0
        %1680 = vmatpush1.msra.mxu0 0.0
        %1681 = vmatprep.subr.mxu0 0.0
        %1682 = vmatpush1.msra.mxu0 0.0
        %1683 = vmatprep.subr.mxu0 0.0
        %1684 = vmatpush1.msra.mxu0 0.0
        %1685 = vmatprep.subr.mxu0 0.0
        %1686 = vmatpush1.msra.mxu0 0.0
        %1687 = vmatprep.subr.mxu0 0.0
        %1688 = vmatpush1.msra.mxu0 0.0
        %1689 = vmatprep.subr.mxu0 0.0
        %1690 = vmatpush1.msra.mxu0 0.0
        %1691 = vmatprep.mubr.f32.mxu0 0.0
        %1692 = vmatmul.mubr.f32.gmra.mrb[0].mxu0 %v1547
        %v1693 = vpop.f32.mrb[0].mxu0
        %v1694 = vadd.f32 0.0, %v1693
        %v1695 = vpop.f32.mrb[0].mxu0
        %1696 = vmatprep.mubr.f32.mxu0 0.0
        %1697 = vmatmul.mubr.f32.gmra.mrb[0].mxu0 %v1550
        %v1698 = vpop.f32.mrb[0].mxu0
        %v1699 = vadd.f32 0.0, %v1698
        %v1700 = vpop.f32.mrb[0].mxu0
        %1701 = vdwg.mxu0
        %1702 = vmatprep.subr.mxu0 0.0
        %1703 = vmatpush1.msra.mxu0 %v1520
        %1704 = vmatprep.subr.mxu0 0.0
        %1705 = vmatpush1.msra.mxu0 %v1522
        %1706 = vmatprep.subr.mxu0 0.0
        %1707 = vmatpush1.msra.mxu0 0.0
        %1708 = vmatprep.subr.mxu0 0.0
        %1709 = vmatpush1.msra.mxu0 0.0
        %1710 = vmatprep.subr.mxu0 0.0
        %1711 = vmatpush1.msra.mxu0 0.0
        %1712 = vmatprep.subr.mxu0 0.0
        %1713 = vmatpush1.msra.mxu0 0.0
        %1714 = vmatprep.subr.mxu0 0.0
        %1715 = vmatpush1.msra.mxu0 0.0
        %1716 = vmatprep.subr.mxu0 0.0
        %1717 = vmatpush1.msra.mxu0 0.0
        %1718 = vmatprep.subr.mxu0 0.0
        %1719 = vmatpush1.msra.mxu0 0.0
        %1720 = vmatprep.subr.mxu0 0.0
        %1721 = vmatpush1.msra.mxu0 0.0
        %1722 = vmatprep.subr.mxu0 0.0
        %1723 = vmatpush1.msra.mxu0 0.0
        %1724 = vmatprep.subr.mxu0 0.0
        %1725 = vmatpush1.msra.mxu0 0.0
        %1726 = vmatprep.subr.mxu0 0.0
        %1727 = vmatpush1.msra.mxu0 0.0
        %1728 = vmatprep.subr.mxu0 0.0
        %1729 = vmatpush1.msra.mxu0 0.0
        %1730 = vmatprep.subr.mxu0 0.0
        %1731 = vmatpush1.msra.mxu0 0.0
        %1732 = vmatprep.subr.mxu0 0.0
        %1733 = vmatpush1.msra.mxu0 0.0
        %1734 = vmatprep.subr.mxu0 0.0
        %1735 = vmatpush1.msra.mxu0 0.0
        %1736 = vmatprep.subr.mxu0 0.0
        %1737 = vmatpush1.msra.mxu0 0.0
        %1738 = vmatprep.subr.mxu0 0.0
        %1739 = vmatpush1.msra.mxu0 0.0
        %1740 = vmatprep.subr.mxu0 0.0
        %1741 = vmatpush1.msra.mxu0 0.0
        %1742 = vmatprep.subr.mxu0 0.0
        %1743 = vmatpush1.msra.mxu0 0.0
        %1744 = vmatprep.subr.mxu0 0.0
        %1745 = vmatpush1.msra.mxu0 0.0
        %1746 = vmatprep.subr.mxu0 0.0
        %1747 = vmatpush1.msra.mxu0 0.0
        %1748 = vmatprep.subr.mxu0 0.0
        %1749 = vmatpush1.msra.mxu0 0.0
        %1750 = vmatprep.subr.mxu0 0.0
        %1751 = vmatpush1.msra.mxu0 0.0
        %1752 = vmatprep.subr.mxu0 0.0
        %1753 = vmatpush1.msra.mxu0 0.0
        %1754 = vmatprep.subr.mxu0 0.0
        %1755 = vmatpush1.msra.mxu0 0.0
        %1756 = vmatprep.subr.mxu0 0.0
        %1757 = vmatpush1.msra.mxu0 0.0
        %1758 = vmatprep.subr.mxu0 0.0
        %1759 = vmatpush1.msra.mxu0 0.0
        %1760 = vmatprep.subr.mxu0 0.0
        %1761 = vmatpush1.msra.mxu0 0.0
        %1762 = vmatprep.subr.mxu0 0.0
        %1763 = vmatpush1.msra.mxu0 0.0
        %1764 = vmatprep.subr.mxu0 0.0
        %1765 = vmatpush1.msra.mxu0 0.0
        %1766 = vmatprep.mubr.f32.mxu0 0.0
        %1767 = vmatmul.mubr.f32.gmra.mrb[0].mxu0 %v1547
        %v1768 = vpop.f32.mrb[0].mxu0
        %v1769 = vadd.f32 0.0, %v1768
        %v1770 = vpop.f32.mrb[0].mxu0
        %1771 = vmatprep.mubr.f32.mxu0 0.0
        %1772 = vmatmul.mubr.f32.gmra.mrb[0].mxu0 %v1550
        %v1773 = vpop.f32.mrb[0].mxu0
        %v1774 = vadd.f32 0.0, %v1773
        %v1775 = vpop.f32.mrb[0].mxu0
        %1776 = vdwg.mxu0
        %1777 = vmatprep.subr.mxu0 0.0
        %1778 = vmatpush1.msra.mxu0 %v1524
        %1779 = vmatprep.subr.mxu0 0.0
        %1780 = vmatpush1.msra.mxu0 %v1526
        %1781 = vmatprep.subr.mxu0 0.0
        %1782 = vmatpush1.msra.mxu0 0.0
        %1783 = vmatprep.subr.mxu0 0.0
        %1784 = vmatpush1.msra.mxu0 0.0
        %1785 = vmatprep.subr.mxu0 0.0
        %1786 = vmatpush1.msra.mxu0 0.0
        %1787 = vmatprep.subr.mxu0 0.0
        %1788 = vmatpush1.msra.mxu0 0.0
        %1789 = vmatprep.subr.mxu0 0.0
        %1790 = vmatpush1.msra.mxu0 0.0
        %1791 = vmatprep.subr.mxu0 0.0
        %1792 = vmatpush1.msra.mxu0 0.0
        %1793 = vmatprep.subr.mxu0 0.0
        %1794 = vmatpush1.msra.mxu0 0.0
        %1795 = vmatprep.subr.mxu0 0.0
        %1796 = vmatpush1.msra.mxu0 0.0
        %1797 = vmatprep.subr.mxu0 0.0
        %1798 = vmatpush1.msra.mxu0 0.0
        %1799 = vmatprep.subr.mxu0 0.0
        %1800 = vmatpush1.msra.mxu0 0.0
        %1801 = vmatprep.subr.mxu0 0.0
        %1802 = vmatpush1.msra.mxu0 0.0
        %1803 = vmatprep.subr.mxu0 0.0
        %1804 = vmatpush1.msra.mxu0 0.0
        %1805 = vmatprep.subr.mxu0 0.0
        %1806 = vmatpush1.msra.mxu0 0.0
        %1807 = vmatprep.subr.mxu0 0.0
        %1808 = vmatpush1.msra.mxu0 0.0
        %1809 = vmatprep.subr.mxu0 0.0
        %1810 = vmatpush1.msra.mxu0 0.0
        %1811 = vmatprep.subr.mxu0 0.0
        %1812 = vmatpush1.msra.mxu0 0.0
        %1813 = vmatprep.subr.mxu0 0.0
        %1814 = vmatpush1.msra.mxu0 0.0
        %1815 = vmatprep.subr.mxu0 0.0
        %1816 = vmatpush1.msra.mxu0 0.0
        %1817 = vmatprep.subr.mxu0 0.0
        %1818 = vmatpush1.msra.mxu0 0.0
        %1819 = vmatprep.subr.mxu0 0.0
        %1820 = vmatpush1.msra.mxu0 0.0
        %1821 = vmatprep.subr.mxu0 0.0
        %1822 = vmatpush1.msra.mxu0 0.0
        %1823 = vmatprep.subr.mxu0 0.0
        %1824 = vmatpush1.msra.mxu0 0.0
        %1825 = vmatprep.subr.mxu0 0.0
        %1826 = vmatpush1.msra.mxu0 0.0
        %1827 = vmatprep.subr.mxu0 0.0
        %1828 = vmatpush1.msra.mxu0 0.0
        %1829 = vmatprep.subr.mxu0 0.0
        %1830 = vmatpush1.msra.mxu0 0.0
        %1831 = vmatprep.subr.mxu0 0.0
        %1832 = vmatpush1.msra.mxu0 0.0
        %1833 = vmatprep.subr.mxu0 0.0
        %1834 = vmatpush1.msra.mxu0 0.0
        %1835 = vmatprep.subr.mxu0 0.0
        %1836 = vmatpush1.msra.mxu0 0.0
        %1837 = vmatprep.subr.mxu0 0.0
        %1838 = vmatpush1.msra.mxu0 0.0
        %1839 = vmatprep.subr.mxu0 0.0
        %1840 = vmatpush1.msra.mxu0 0.0
        %1841 = vmatprep.mubr.f32.mxu0 0.0
        %1842 = vmatmul.mubr.f32.gmra.mrb[0].mxu0 %v1547
        %v1843 = vpop.f32.mrb[0].mxu0
        %v1844 = vadd.f32 0.0, %v1843
        %v1845 = vpop.f32.mrb[0].mxu0
        %1846 = vmatprep.mubr.f32.mxu0 0.0
        %1847 = vmatmul.mubr.f32.gmra.mrb[0].mxu0 %v1550
        %v1848 = vpop.f32.mrb[0].mxu0
        %v1849 = vadd.f32 0.0, %v1848
        %v1850 = vpop.f32.mrb[0].mxu0
        %1851 = vdwg.mxu0
        %1852 = vmatprep.subr.mxu0 0.0
        %1853 = vmatpush1.msra.mxu0 %v1528
        %1854 = vmatprep.subr.mxu0 0.0
        %1855 = vmatpush1.msra.mxu0 %v1530
        %1856 = vmatprep.subr.mxu0 0.0
        %1857 = vmatpush1.msra.mxu0 0.0
        %1858 = vmatprep.subr.mxu0 0.0
        %1859 = vmatpush1.msra.mxu0 0.0
        %1860 = vmatprep.subr.mxu0 0.0
        %1861 = vmatpush1.msra.mxu0 0.0
        %1862 = vmatprep.subr.mxu0 0.0
        %1863 = vmatpush1.msra.mxu0 0.0
        %1864 = vmatprep.subr.mxu0 0.0
        %1865 = vmatpush1.msra.mxu0 0.0
        %1866 = vmatprep.subr.mxu0 0.0
        %1867 = vmatpush1.msra.mxu0 0.0
        %1868 = vmatprep.subr.mxu0 0.0
        %1869 = vmatpush1.msra.mxu0 0.0
        %1870 = vmatprep.subr.mxu0 0.0
        %1871 = vmatpush1.msra.mxu0 0.0
        %1872 = vmatprep.subr.mxu0 0.0
        %1873 = vmatpush1.msra.mxu0 0.0
        %1874 = vmatprep.subr.mxu0 0.0
        %1875 = vmatpush1.msra.mxu0 0.0
        %1876 = vmatprep.subr.mxu0 0.0
        %1877 = vmatpush1.msra.mxu0 0.0
        %1878 = vmatprep.subr.mxu0 0.0
        %1879 = vmatpush1.msra.mxu0 0.0
        %1880 = vmatprep.subr.mxu0 0.0
        %1881 = vmatpush1.msra.mxu0 0.0
        %1882 = vmatprep.subr.mxu0 0.0
        %1883 = vmatpush1.msra.mxu0 0.0
        %1884 = vmatprep.subr.mxu0 0.0
        %1885 = vmatpush1.msra.mxu0 0.0
        %1886 = vmatprep.subr.mxu0 0.0
        %1887 = vmatpush1.msra.mxu0 0.0
        %1888 = vmatprep.subr.mxu0 0.0
        %1889 = vmatpush1.msra.mxu0 0.0
        %1890 = vmatprep.subr.mxu0 0.0
        %1891 = vmatpush1.msra.mxu0 0.0
        %1892 = vmatprep.subr.mxu0 0.0
        %1893 = vmatpush1.msra.mxu0 0.0
        %1894 = vmatprep.subr.mxu0 0.0
        %1895 = vmatpush1.msra.mxu0 0.0
        %1896 = vmatprep.subr.mxu0 0.0
        %1897 = vmatpush1.msra.mxu0 0.0
        %1898 = vmatprep.subr.mxu0 0.0
        %1899 = vmatpush1.msra.mxu0 0.0
        %1900 = vmatprep.subr.mxu0 0.0
        %1901 = vmatpush1.msra.mxu0 0.0
        %1902 = vmatprep.subr.mxu0 0.0
        %1903 = vmatpush1.msra.mxu0 0.0
        %1904 = vmatprep.subr.mxu0 0.0
        %1905 = vmatpush1.msra.mxu0 0.0
        %1906 = vmatprep.subr.mxu0 0.0
        %1907 = vmatpush1.msra.mxu0 0.0
        %1908 = vmatprep.subr.mxu0 0.0
        %1909 = vmatpush1.msra.mxu0 0.0
        %1910 = vmatprep.subr.mxu0 0.0
        %1911 = vmatpush1.msra.mxu0 0.0
        %1912 = vmatprep.subr.mxu0 0.0
        %1913 = vmatpush1.msra.mxu0 0.0
        %1914 = vmatprep.subr.mxu0 0.0
        %1915 = vmatpush1.msra.mxu0 0.0
        %1916 = vmatprep.mubr.f32.mxu0 0.0
        %1917 = vmatmul.mubr.f32.gmra.mrb[0].mxu0 %v1547
        %v1918 = vpop.f32.mrb[0].mxu0
        %v1919 = vadd.f32 0.0, %v1918
        %v1920 = vpop.f32.mrb[0].mxu0
        %1921 = vmatprep.mubr.f32.mxu0 0.0
        %1922 = vmatmul.mubr.f32.gmra.mrb[0].mxu0 %v1550
        %v1923 = vpop.f32.mrb[0].mxu0
        %v1924 = vadd.f32 0.0, %v1923
        %v1925 = vpop.f32.mrb[0].mxu0
        %1926 = vdwg.mxu0
        %1927 = vmatprep.subr.mxu0 0.0
        %1928 = vmatpush1.msra.mxu0 %v1532
        %1929 = vmatprep.subr.mxu0 0.0
        %1930 = vmatpush1.msra.mxu0 %v1534
        %1931 = vmatprep.subr.mxu0 0.0
        %1932 = vmatpush1.msra.mxu0 0.0
        %1933 = vmatprep.subr.mxu0 0.0
        %1934 = vmatpush1.msra.mxu0 0.0
        %1935 = vmatprep.subr.mxu0 0.0
        %1936 = vmatpush1.msra.mxu0 0.0
        %1937 = vmatprep.subr.mxu0 0.0
        %1938 = vmatpush1.msra.mxu0 0.0
        %1939 = vmatprep.subr.mxu0 0.0
        %1940 = vmatpush1.msra.mxu0 0.0
        %1941 = vmatprep.subr.mxu0 0.0
        %1942 = vmatpush1.msra.mxu0 0.0
        %1943 = vmatprep.subr.mxu0 0.0
        %1944 = vmatpush1.msra.mxu0 0.0
        %1945 = vmatprep.subr.mxu0 0.0
        %1946 = vmatpush1.msra.mxu0 0.0
        %1947 = vmatprep.subr.mxu0 0.0
        %1948 = vmatpush1.msra.mxu0 0.0
        %1949 = vmatprep.subr.mxu0 0.0
        %1950 = vmatpush1.msra.mxu0 0.0
        %1951 = vmatprep.subr.mxu0 0.0
        %1952 = vmatpush1.msra.mxu0 0.0
        %1953 = vmatprep.subr.mxu0 0.0
        %1954 = vmatpush1.msra.mxu0 0.0
        %1955 = vmatprep.subr.mxu0 0.0
        %1956 = vmatpush1.msra.mxu0 0.0
        %1957 = vmatprep.subr.mxu0 0.0
        %1958 = vmatpush1.msra.mxu0 0.0
        %1959 = vmatprep.subr.mxu0 0.0
        %1960 = vmatpush1.msra.mxu0 0.0
        %1961 = vmatprep.subr.mxu0 0.0
        %1962 = vmatpush1.msra.mxu0 0.0
        %1963 = vmatprep.subr.mxu0 0.0
        %1964 = vmatpush1.msra.mxu0 0.0
        %1965 = vmatprep.subr.mxu0 0.0
        %1966 = vmatpush1.msra.mxu0 0.0
        %1967 = vmatprep.subr.mxu0 0.0
        %1968 = vmatpush1.msra.mxu0 0.0
        %1969 = vmatprep.subr.mxu0 0.0
        %1970 = vmatpush1.msra.mxu0 0.0
        %1971 = vmatprep.subr.mxu0 0.0
        %1972 = vmatpush1.msra.mxu0 0.0
        %1973 = vmatprep.subr.mxu0 0.0
        %1974 = vmatpush1.msra.mxu0 0.0
        %1975 = vmatprep.subr.mxu0 0.0
        %1976 = vmatpush1.msra.mxu0 0.0
        %1977 = vmatprep.subr.mxu0 0.0
        %1978 = vmatpush1.msra.mxu0 0.0
        %1979 = vmatprep.subr.mxu0 0.0
        %1980 = vmatpush1.msra.mxu0 0.0
        %1981 = vmatprep.subr.mxu0 0.0
        %1982 = vmatpush1.msra.mxu0 0.0
        %1983 = vmatprep.subr.mxu0 0.0
        %1984 = vmatpush1.msra.mxu0 0.0
        %1985 = vmatprep.subr.mxu0 0.0
        %1986 = vmatpush1.msra.mxu0 0.0
        %1987 = vmatprep.subr.mxu0 0.0
        %1988 = vmatpush1.msra.mxu0 0.0
        %1989 = vmatprep.subr.mxu0 0.0
        %1990 = vmatpush1.msra.mxu0 0.0
        %1991 = vmatprep.mubr.f32.mxu0 0.0
        %1992 = vmatmul.mubr.f32.gmra.mrb[0].mxu0 %v1547
        %v1993 = vpop.f32.mrb[0].mxu0
        %v1994 = vadd.f32 0.0, %v1993
        %v1995 = vpop.f32.mrb[0].mxu0
        %1996 = vmatprep.mubr.f32.mxu0 0.0
        %1997 = vmatmul.mubr.f32.gmra.mrb[0].mxu0 %v1550
        %v1998 = vpop.f32.mrb[0].mxu0
        %v1999 = vadd.f32 0.0, %v1998
        %v2000 = vpop.f32.mrb[0].mxu0
        %2001 = vdwg.mxu0
        %2002 = vmatprep.subr.mxu0 0.0
        %2003 = vmatpush1.msra.mxu0 %v1536
        %2004 = vmatprep.subr.mxu0 0.0
        %2005 = vmatpush1.msra.mxu0 %v1538
        %2006 = vmatprep.subr.mxu0 0.0
        %2007 = vmatpush1.msra.mxu0 0.0
        %2008 = vmatprep.subr.mxu0 0.0
        %2009 = vmatpush1.msra.mxu0 0.0
        %2010 = vmatprep.subr.mxu0 0.0
        %2011 = vmatpush1.msra.mxu0 0.0
        %2012 = vmatprep.subr.mxu0 0.0
        %2013 = vmatpush1.msra.mxu0 0.0
        %2014 = vmatprep.subr.mxu0 0.0
        %2015 = vmatpush1.msra.mxu0 0.0
        %2016 = vmatprep.subr.mxu0 0.0
        %2017 = vmatpush1.msra.mxu0 0.0
        %2018 = vmatprep.subr.mxu0 0.0
        %2019 = vmatpush1.msra.mxu0 0.0
        %2020 = vmatprep.subr.mxu0 0.0
        %2021 = vmatpush1.msra.mxu0 0.0
        %2022 = vmatprep.subr.mxu0 0.0
        %2023 = vmatpush1.msra.mxu0 0.0
        %2024 = vmatprep.subr.mxu0 0.0
        %2025 = vmatpush1.msra.mxu0 0.0
        %2026 = vmatprep.subr.mxu0 0.0
        %2027 = vmatpush1.msra.mxu0 0.0
        %2028 = vmatprep.subr.mxu0 0.0
        %2029 = vmatpush1.msra.mxu0 0.0
        %2030 = vmatprep.subr.mxu0 0.0
        %2031 = vmatpush1.msra.mxu0 0.0
        %2032 = vmatprep.subr.mxu0 0.0
        %2033 = vmatpush1.msra.mxu0 0.0
        %2034 = vmatprep.subr.mxu0 0.0
        %2035 = vmatpush1.msra.mxu0 0.0
        %2036 = vmatprep.subr.mxu0 0.0
        %2037 = vmatpush1.msra.mxu0 0.0
        %2038 = vmatprep.subr.mxu0 0.0
        %2039 = vmatpush1.msra.mxu0 0.0
        %2040 = vmatprep.subr.mxu0 0.0
        %2041 = vmatpush1.msra.mxu0 0.0
        %2042 = vmatprep.subr.mxu0 0.0
        %2043 = vmatpush1.msra.mxu0 0.0
        %2044 = vmatprep.subr.mxu0 0.0
        %2045 = vmatpush1.msra.mxu0 0.0
        %2046 = vmatprep.subr.mxu0 0.0
        %2047 = vmatpush1.msra.mxu0 0.0
        %2048 = vmatprep.subr.mxu0 0.0
        %2049 = vmatpush1.msra.mxu0 0.0
        %2050 = vmatprep.subr.mxu0 0.0
        %2051 = vmatpush1.msra.mxu0 0.0
        %2052 = vmatprep.subr.mxu0 0.0
        %2053 = vmatpush1.msra.mxu0 0.0
        %2054 = vmatprep.subr.mxu0 0.0
        %2055 = vmatpush1.msra.mxu0 0.0
        %2056 = vmatprep.subr.mxu0 0.0
        %2057 = vmatpush1.msra.mxu0 0.0
        %2058 = vmatprep.subr.mxu0 0.0
        %2059 = vmatpush1.msra.mxu0 0.0
        %2060 = vmatprep.subr.mxu0 0.0
        %2061 = vmatpush1.msra.mxu0 0.0
        %2062 = vmatprep.subr.mxu0 0.0
        %2063 = vmatpush1.msra.mxu0 0.0
        %2064 = vmatprep.subr.mxu0 0.0
        %2065 = vmatpush1.msra.mxu0 0.0
        %2066 = vmatprep.mubr.f32.mxu0 0.0
        %2067 = vmatmul.mubr.f32.gmra.mrb[0].mxu0 %v1547
        %v2068 = vpop.f32.mrb[0].mxu0
        %v2069 = vadd.f32 0.0, %v2068
        %v2070 = vpop.f32.mrb[0].mxu0
        %2071 = vmatprep.mubr.f32.mxu0 0.0
        %2072 = vmatmul.mubr.f32.gmra.mrb[0].mxu0 %v1550
        %v2073 = vpop.f32.mrb[0].mxu0
        %v2074 = vadd.f32 0.0, %v2073
        %v2075 = vpop.f32.mrb[0].mxu0
        %2076 = vdwg.mxu0
        %2077 = vmatprep.subr.mxu0 0.0
        %2078 = vmatpush1.msra.mxu0 %v1540
        %2079 = vmatprep.subr.mxu0 0.0
        %2080 = vmatpush1.msra.mxu0 %v1542
        %2081 = vmatprep.subr.mxu0 0.0
        %2082 = vmatpush1.msra.mxu0 0.0
        %2083 = vmatprep.subr.mxu0 0.0
        %2084 = vmatpush1.msra.mxu0 0.0
        %2085 = vmatprep.subr.mxu0 0.0
        %2086 = vmatpush1.msra.mxu0 0.0
        %2087 = vmatprep.subr.mxu0 0.0
        %2088 = vmatpush1.msra.mxu0 0.0
        %2089 = vmatprep.subr.mxu0 0.0
        %2090 = vmatpush1.msra.mxu0 0.0
        %2091 = vmatprep.subr.mxu0 0.0
        %2092 = vmatpush1.msra.mxu0 0.0
        %2093 = vmatprep.subr.mxu0 0.0
        %2094 = vmatpush1.msra.mxu0 0.0
        %2095 = vmatprep.subr.mxu0 0.0
        %2096 = vmatpush1.msra.mxu0 0.0
        %2097 = vmatprep.subr.mxu0 0.0
        %2098 = vmatpush1.msra.mxu0 0.0
        %2099 = vmatprep.subr.mxu0 0.0
        %2100 = vmatpush1.msra.mxu0 0.0
        %2101 = vmatprep.subr.mxu0 0.0
        %2102 = vmatpush1.msra.mxu0 0.0
        %2103 = vmatprep.subr.mxu0 0.0
        %2104 = vmatpush1.msra.mxu0 0.0
        %2105 = vmatprep.subr.mxu0 0.0
        %2106 = vmatpush1.msra.mxu0 0.0
        %2107 = vmatprep.subr.mxu0 0.0
        %2108 = vmatpush1.msra.mxu0 0.0
        %2109 = vmatprep.subr.mxu0 0.0
        %2110 = vmatpush1.msra.mxu0 0.0
        %2111 = vmatprep.subr.mxu0 0.0
        %2112 = vmatpush1.msra.mxu0 0.0
        %2113 = vmatprep.subr.mxu0 0.0
        %2114 = vmatpush1.msra.mxu0 0.0
        %2115 = vmatprep.subr.mxu0 0.0
        %2116 = vmatpush1.msra.mxu0 0.0
        %2117 = vmatprep.subr.mxu0 0.0
        %2118 = vmatpush1.msra.mxu0 0.0
        %2119 = vmatprep.subr.mxu0 0.0
        %2120 = vmatpush1.msra.mxu0 0.0
        %2121 = vmatprep.subr.mxu0 0.0
        %2122 = vmatpush1.msra.mxu0 0.0
        %2123 = vmatprep.subr.mxu0 0.0
        %2124 = vmatpush1.msra.mxu0 0.0
        %2125 = vmatprep.subr.mxu0 0.0
        %2126 = vmatpush1.msra.mxu0 0.0
        %2127 = vmatprep.subr.mxu0 0.0
        %2128 = vmatpush1.msra.mxu0 0.0
        %2129 = vmatprep.subr.mxu0 0.0
        %2130 = vmatpush1.msra.mxu0 0.0
        %2131 = vmatprep.subr.mxu0 0.0
        %2132 = vmatpush1.msra.mxu0 0.0
        %2133 = vmatprep.subr.mxu0 0.0
        %2134 = vmatpush1.msra.mxu0 0.0
        %2135 = vmatprep.subr.mxu0 0.0
        %2136 = vmatpush1.msra.mxu0 0.0
        %2137 = vmatprep.subr.mxu0 0.0
        %2138 = vmatpush1.msra.mxu0 0.0
        %2139 = vmatprep.subr.mxu0 0.0
        %2140 = vmatpush1.msra.mxu0 0.0
        %2141 = vmatprep.mubr.f32.mxu0 0.0
        %2142 = vmatmul.mubr.f32.gmra.mrb[0].mxu0 %v1547
        %v2143 = vpop.f32.mrb[0].mxu0
        %v2144 = vadd.f32 0.0, %v2143
        %v2145 = vpop.f32.mrb[0].mxu0
        %2146 = vmatprep.mubr.f32.mxu0 0.0
        %2147 = vmatmul.mubr.f32.gmra.mrb[0].mxu0 %v1550
        %v2148 = vpop.f32.mrb[0].mxu0
        %v2149 = vadd.f32 0.0, %v2148
        %v2150 = vpop.f32.mrb[0].mxu0
        %2151 = vdwg.mxu0
        %v2152 = vrcp.pop %v1619
        %v2153 = vmul.f32 %v1512, %v2152
        %v2154 = vrcp.pop %v1624
        %v2155 = vmul.f32 %v1514, %v2154
        %v2156 = vrcp.pop %v1694
        %v2157 = vmul.f32 %v1516, %v2156
        %v2158 = vrcp.pop %v1699
        %v2159 = vmul.f32 %v1518, %v2158
        %v2160 = vrcp.pop %v1769
        %v2161 = vmul.f32 %v1520, %v2160
        %v2162 = vrcp.pop %v1774
        %v2163 = vmul.f32 %v1522, %v2162
        %v2164 = vrcp.pop %v1844
        %v2165 = vmul.f32 %v1524, %v2164
        %v2166 = vrcp.pop %v1849
        %v2167 = vmul.f32 %v1526, %v2166
        %v2168 = vrcp.pop %v1919
        %v2169 = vmul.f32 %v1528, %v2168
        %v2170 = vrcp.pop %v1924
        %v2171 = vmul.f32 %v1530, %v2170
        %v2172 = vrcp.pop %v1994
        %v2173 = vmul.f32 %v1532, %v2172
        %v2174 = vrcp.pop %v1999
        %v2175 = vmul.f32 %v1534, %v2174
        %v2176 = vrcp.pop %v2069
        %v2177 = vmul.f32 %v1536, %v2176
        %v2178 = vrcp.pop %v2074
        %v2179 = vmul.f32 %v1538, %v2178
        %v2180 = vrcp.pop %v2144
        %v2181 = vmul.f32 %v1540, %v2180
        %v2182 = vrcp.pop %v2149
        %v2183 = vmul.f32 %v1542, %v2182
        %v2184 = vld [vmem:[%s504] sm:$0xff]
        %v2185 = vlaneseq
        %v2186 = vshrl.u32 %v2185, 7
        %v2187 = vsub.s32 0, %v2186
        %v2188 = vrot.slane %v2184, %v2187
        %2190 = vbcast.lane.b32.xlu0 %v2188, 256
        %v2191 = vpop.permute.xlu0 %2190
        %s2193 = sor.u32 256, 8
        %2194 = vbcast.lane.b32.xlu0 %v2188, %s2193
        %v2195 = vpop.permute.xlu0 %2194
        %v2196 = vlaneseq
        %v2197 = vshrl.u32 %v2196, 7
        %v2198 = vsub.s32 1, %v2197
        %v2199 = vrot.slane %v2184, %v2198
        %2201 = vbcast.lane.b32.xlu0 %v2199, 256
        %v2202 = vpop.permute.xlu0 %2201
        %s2204 = sor.u32 256, 8
        %2205 = vbcast.lane.b32.xlu0 %v2199, %s2204
        %v2206 = vpop.permute.xlu0 %2205
        %v2207 = vlaneseq
        %v2208 = vshrl.u32 %v2207, 7
        %v2209 = vsub.s32 2, %v2208
        %v2210 = vrot.slane %v2184, %v2209
        %2212 = vbcast.lane.b32.xlu0 %v2210, 256
        %v2213 = vpop.permute.xlu0 %2212
        %s2215 = sor.u32 256, 8
        %2216 = vbcast.lane.b32.xlu0 %v2210, %s2215
        %v2217 = vpop.permute.xlu0 %2216
        %v2218 = vlaneseq
        %v2219 = vshrl.u32 %v2218, 7
        %v2220 = vsub.s32 3, %v2219
        %v2221 = vrot.slane %v2184, %v2220
        %2223 = vbcast.lane.b32.xlu0 %v2221, 256
        %v2224 = vpop.permute.xlu0 %2223
        %s2226 = sor.u32 256, 8
        %2227 = vbcast.lane.b32.xlu0 %v2221, %s2226
        %v2228 = vpop.permute.xlu0 %2227
        %v2229 = vlaneseq
        %v2230 = vshrl.u32 %v2229, 7
        %v2231 = vsub.s32 4, %v2230
        %v2232 = vrot.slane %v2184, %v2231
        %2234 = vbcast.lane.b32.xlu0 %v2232, 256
        %v2235 = vpop.permute.xlu0 %2234
        %s2237 = sor.u32 256, 8
        %2238 = vbcast.lane.b32.xlu0 %v2232, %s2237
        %v2239 = vpop.permute.xlu0 %2238
        %v2240 = vlaneseq
        %v2241 = vshrl.u32 %v2240, 7
        %v2242 = vsub.s32 5, %v2241
        %v2243 = vrot.slane %v2184, %v2242
        %2245 = vbcast.lane.b32.xlu0 %v2243, 256
        %v2246 = vpop.permute.xlu0 %2245
        %s2248 = sor.u32 256, 8
        %2249 = vbcast.lane.b32.xlu0 %v2243, %s2248
        %v2250 = vpop.permute.xlu0 %2249
        %v2251 = vlaneseq
        %v2252 = vshrl.u32 %v2251, 7
        %v2253 = vsub.s32 6, %v2252
        %v2254 = vrot.slane %v2184, %v2253
        %2256 = vbcast.lane.b32.xlu0 %v2254, 256
        %v2257 = vpop.permute.xlu0 %2256
        %s2259 = sor.u32 256, 8
        %2260 = vbcast.lane.b32.xlu0 %v2254, %s2259
        %v2261 = vpop.permute.xlu0 %2260
        %v2262 = vlaneseq
        %v2263 = vshrl.u32 %v2262, 7
        %v2264 = vsub.s32 7, %v2263
        %v2265 = vrot.slane %v2184, %v2264
        %2267 = vbcast.lane.b32.xlu0 %v2265, 256
        %v2268 = vpop.permute.xlu0 %2267
        %s2270 = sor.u32 256, 8
        %2271 = vbcast.lane.b32.xlu0 %v2265, %s2270
        %v2272 = vpop.permute.xlu0 %2271
        %v2273 = vmul.f32 %v2191, %v2153
        %v2274 = vmul.f32 %v2195, %v2155
        %v2275 = vmul.f32 %v2202, %v2157
        %v2276 = vmul.f32 %v2206, %v2159
        %v2277 = vmul.f32 %v2213, %v2161
        %v2278 = vmul.f32 %v2217, %v2163
        %v2279 = vmul.f32 %v2224, %v2165
        %v2280 = vmul.f32 %v2228, %v2167
        %v2281 = vmul.f32 %v2235, %v2169
        %v2282 = vmul.f32 %v2239, %v2171
        %v2283 = vmul.f32 %v2246, %v2173
        %v2284 = vmul.f32 %v2250, %v2175
        %v2285 = vmul.f32 %v2257, %v2177
        %v2286 = vmul.f32 %v2261, %v2179
        %v2287 = vmul.f32 %v2268, %v2181
        %v2288 = vmul.f32 %v2272, %v2183
        %v2289 = vld [vmem:[%s12] sm:$0xf]
        %v2291 = vsel %vm1225, %v2273, 0
        %v2294 = vsel %vm1225, %v2274, 0
        %v2297 = vsel %vm1225, %v2275, 0
        %v2300 = vsel %vm1225, %v2276, 0
        %v2303 = vsel %vm1225, %v2277, 0
        %v2306 = vsel %vm1225, %v2278, 0
        %v2309 = vsel %vm1225, %v2279, 0
        %v2312 = vsel %vm1225, %v2280, 0
        %v2315 = vsel %vm1225, %v2281, 0
        %v2318 = vsel %vm1225, %v2282, 0
        %v2321 = vsel %vm1225, %v2283, 0
        %v2324 = vsel %vm1225, %v2284, 0
        %v2327 = vsel %vm1225, %v2285, 0
        %v2330 = vsel %vm1225, %v2286, 0
        %v2333 = vsel %vm1225, %v2287, 0
        %v2336 = vsel %vm1225, %v2288, 0
        %v2339 = vsel %vm1274, %v2289, 0
        %2341 = vmatprep.subr.mxu0 0.0
        %2342 = vmatpush1.msra.mxu0 %v2339
        %2343 = vmatprep.subr.mxu0 0.0
        %2344 = vmatpush1.msra.mxu0 0.0
        %2345 = vmatprep.subr.mxu0 0.0
        %2346 = vmatpush1.msra.mxu0 0.0
        %2347 = vmatprep.subr.mxu0 0.0
        %2348 = vmatpush1.msra.mxu0 0.0
        %2349 = vmatprep.subr.mxu0 0.0
        %2350 = vmatpush1.msra.mxu0 0.0
        %2351 = vmatprep.subr.mxu0 0.0
        %2352 = vmatpush1.msra.mxu0 0.0
        %2353 = vmatprep.subr.mxu0 0.0
        %2354 = vmatpush1.msra.mxu0 0.0
        %2355 = vmatprep.subr.mxu0 0.0
        %2356 = vmatpush1.msra.mxu0 0.0
        %2357 = vmatprep.subr.mxu0 0.0
        %2358 = vmatpush1.msra.mxu0 0.0
        %2359 = vmatprep.subr.mxu0 0.0
        %2360 = vmatpush1.msra.mxu0 0.0
        %2361 = vmatprep.subr.mxu0 0.0
        %2362 = vmatpush1.msra.mxu0 0.0
        %2363 = vmatprep.subr.mxu0 0.0
        %2364 = vmatpush1.msra.mxu0 0.0
        %2365 = vmatprep.subr.mxu0 0.0
        %2366 = vmatpush1.msra.mxu0 0.0
        %2367 = vmatprep.subr.mxu0 0.0
        %2368 = vmatpush1.msra.mxu0 0.0
        %2369 = vmatprep.subr.mxu0 0.0
        %2370 = vmatpush1.msra.mxu0 0.0
        %2371 = vmatprep.subr.mxu0 0.0
        %2372 = vmatpush1.msra.mxu0 0.0
        %2373 = vmatprep.subr.mxu0 0.0
        %2374 = vmatpush1.msra.mxu0 0.0
        %2375 = vmatprep.subr.mxu0 0.0
        %2376 = vmatpush1.msra.mxu0 0.0
        %2377 = vmatprep.subr.mxu0 0.0
        %2378 = vmatpush1.msra.mxu0 0.0
        %2379 = vmatprep.subr.mxu0 0.0
        %2380 = vmatpush1.msra.mxu0 0.0
        %2381 = vmatprep.subr.mxu0 0.0
        %2382 = vmatpush1.msra.mxu0 0.0
        %2383 = vmatprep.subr.mxu0 0.0
        %2384 = vmatpush1.msra.mxu0 0.0
        %2385 = vmatprep.subr.mxu0 0.0
        %2386 = vmatpush1.msra.mxu0 0.0
        %2387 = vmatprep.subr.mxu0 0.0
        %2388 = vmatpush1.msra.mxu0 0.0
        %2389 = vmatprep.subr.mxu0 0.0
        %2390 = vmatpush1.msra.mxu0 0.0
        %2391 = vmatprep.subr.mxu0 0.0
        %2392 = vmatpush1.msra.mxu0 0.0
        %2393 = vmatprep.subr.mxu0 0.0
        %2394 = vmatpush1.msra.mxu0 0.0
        %2395 = vmatprep.subr.mxu0 0.0
        %2396 = vmatpush1.msra.mxu0 0.0
        %2397 = vmatprep.subr.mxu0 0.0
        %2398 = vmatpush1.msra.mxu0 0.0
        %2399 = vmatprep.subr.mxu0 0.0
        %2400 = vmatpush1.msra.mxu0 0.0
        %2401 = vmatprep.subr.mxu0 0.0
        %2402 = vmatpush1.msra.mxu0 0.0
        %2403 = vmatprep.subr.mxu0 0.0
        %2404 = vmatpush1.msra.mxu0 0.0
        %2405 = vmatprep.mubr.f32.mxu0 0.0
        %2406 = vmatmul.mubr.f32.gmra.mrb[0].mxu0 %v2291
        %v2407 = vpop.f32.mrb[0].mxu0
        %v2408 = vadd.f32 0.0, %v2407
        %v2409 = vpop.f32.mrb[0].mxu0
        %2410 = vmatprep.mubr.f32.mxu0 0.0
        %2411 = vmatmul.mubr.f32.gmra.mrb[0].mxu0 %v2294
        %v2412 = vpop.f32.mrb[0].mxu0
        %v2413 = vadd.f32 0.0, %v2412
        %v2414 = vpop.f32.mrb[0].mxu0
        %2415 = vmatprep.mubr.f32.mxu0 0.0
        %2416 = vmatmul.mubr.f32.gmra.mrb[0].mxu0 %v2297
        %v2417 = vpop.f32.mrb[0].mxu0
        %v2418 = vadd.f32 0.0, %v2417
        %v2419 = vpop.f32.mrb[0].mxu0
        %2420 = vmatprep.mubr.f32.mxu0 0.0
        %2421 = vmatmul.mubr.f32.gmra.mrb[0].mxu0 %v2300
        %v2422 = vpop.f32.mrb[0].mxu0
        %v2423 = vadd.f32 0.0, %v2422
        %v2424 = vpop.f32.mrb[0].mxu0
        %2425 = vmatprep.mubr.f32.mxu0 0.0
        %2426 = vmatmul.mubr.f32.gmra.mrb[0].mxu0 %v2303
        %v2427 = vpop.f32.mrb[0].mxu0
        %v2428 = vadd.f32 0.0, %v2427
        %v2429 = vpop.f32.mrb[0].mxu0
        %2430 = vmatprep.mubr.f32.mxu0 0.0
        %2431 = vmatmul.mubr.f32.gmra.mrb[0].mxu0 %v2306
        %v2432 = vpop.f32.mrb[0].mxu0
        %v2433 = vadd.f32 0.0, %v2432
        %v2434 = vpop.f32.mrb[0].mxu0
        %2435 = vmatprep.mubr.f32.mxu0 0.0
        %2436 = vmatmul.mubr.f32.gmra.mrb[0].mxu0 %v2309
        %v2437 = vpop.f32.mrb[0].mxu0
        %v2438 = vadd.f32 0.0, %v2437
        %v2439 = vpop.f32.mrb[0].mxu0
        %2440 = vmatprep.mubr.f32.mxu0 0.0
        %2441 = vmatmul.mubr.f32.gmra.mrb[0].mxu0 %v2312
        %v2442 = vpop.f32.mrb[0].mxu0
        %v2443 = vadd.f32 0.0, %v2442
        %v2444 = vpop.f32.mrb[0].mxu0
        %2445 = vmatprep.mubr.f32.mxu0 0.0
        %2446 = vmatmul.mubr.f32.gmra.mrb[0].mxu0 %v2315
        %v2447 = vpop.f32.mrb[0].mxu0
        %v2448 = vadd.f32 0.0, %v2447
        %v2449 = vpop.f32.mrb[0].mxu0
        %2450 = vmatprep.mubr.f32.mxu0 0.0
        %2451 = vmatmul.mubr.f32.gmra.mrb[0].mxu0 %v2318
        %v2452 = vpop.f32.mrb[0].mxu0
        %v2453 = vadd.f32 0.0, %v2452
        %v2454 = vpop.f32.mrb[0].mxu0
        %2455 = vmatprep.mubr.f32.mxu0 0.0
        %2456 = vmatmul.mubr.f32.gmra.mrb[0].mxu0 %v2321
        %v2457 = vpop.f32.mrb[0].mxu0
        %v2458 = vadd.f32 0.0, %v2457
        %v2459 = vpop.f32.mrb[0].mxu0
        %2460 = vmatprep.mubr.f32.mxu0 0.0
        %2461 = vmatmul.mubr.f32.gmra.mrb[0].mxu0 %v2324
        %v2462 = vpop.f32.mrb[0].mxu0
        %v2463 = vadd.f32 0.0, %v2462
        %v2464 = vpop.f32.mrb[0].mxu0
        %2465 = vmatprep.mubr.f32.mxu0 0.0
        %2466 = vmatmul.mubr.f32.gmra.mrb[0].mxu0 %v2327
        %v2467 = vpop.f32.mrb[0].mxu0
        %v2468 = vadd.f32 0.0, %v2467
        %v2469 = vpop.f32.mrb[0].mxu0
        %2470 = vmatprep.mubr.f32.mxu0 0.0
        %2471 = vmatmul.mubr.f32.gmra.mrb[0].mxu0 %v2330
        %v2472 = vpop.f32.mrb[0].mxu0
        %v2473 = vadd.f32 0.0, %v2472
        %v2474 = vpop.f32.mrb[0].mxu0
        %2475 = vmatprep.mubr.f32.mxu0 0.0
        %2476 = vmatmul.mubr.f32.gmra.mrb[0].mxu0 %v2333
        %v2477 = vpop.f32.mrb[0].mxu0
        %v2478 = vadd.f32 0.0, %v2477
        %v2479 = vpop.f32.mrb[0].mxu0
        %2480 = vmatprep.mubr.f32.mxu0 0.0
        %2481 = vmatmul.mubr.f32.gmra.mrb[0].mxu0 %v2336
        %v2482 = vpop.f32.mrb[0].mxu0
        %v2483 = vadd.f32 0.0, %v2482
        %v2484 = vpop.f32.mrb[0].mxu0
        %2485 = vdwg.mxu0
        %v2486 = vld [vmem:[%s13] sm:$0xff]
        %2487 = vmatprep.subr.mxu0 0.0
        %2488 = vmatpush1.msra.mxu0 %v2486
        %2489 = vmatprep.subr.mxu0 0.0
        %2490 = vmatpush1.msra.mxu0 0.0
        %2491 = vmatprep.subr.mxu0 0.0
        %2492 = vmatpush1.msra.mxu0 0.0
        %2493 = vmatprep.subr.mxu0 0.0
        %2494 = vmatpush1.msra.mxu0 0.0
        %2495 = vmatprep.subr.mxu0 0.0
        %2496 = vmatpush1.msra.mxu0 0.0
        %2497 = vmatprep.subr.mxu0 0.0
        %2498 = vmatpush1.msra.mxu0 0.0
        %2499 = vmatprep.subr.mxu0 0.0
        %2500 = vmatpush1.msra.mxu0 0.0
        %2501 = vmatprep.subr.mxu0 0.0
        %2502 = vmatpush1.msra.mxu0 0.0
        %2503 = vmatprep.subr.mxu0 0.0
        %2504 = vmatpush1.msra.mxu0 0.0
        %2505 = vmatprep.subr.mxu0 0.0
        %2506 = vmatpush1.msra.mxu0 0.0
        %2507 = vmatprep.subr.mxu0 0.0
        %2508 = vmatpush1.msra.mxu0 0.0
        %2509 = vmatprep.subr.mxu0 0.0
        %2510 = vmatpush1.msra.mxu0 0.0
        %2511 = vmatprep.subr.mxu0 0.0
        %2512 = vmatpush1.msra.mxu0 0.0
        %2513 = vmatprep.subr.mxu0 0.0
        %2514 = vmatpush1.msra.mxu0 0.0
        %2515 = vmatprep.subr.mxu0 0.0
        %2516 = vmatpush1.msra.mxu0 0.0
        %2517 = vmatprep.subr.mxu0 0.0
        %2518 = vmatpush1.msra.mxu0 0.0
        %2519 = vmatprep.subr.mxu0 0.0
        %2520 = vmatpush1.msra.mxu0 0.0
        %2521 = vmatprep.subr.mxu0 0.0
        %2522 = vmatpush1.msra.mxu0 0.0
        %2523 = vmatprep.subr.mxu0 0.0
        %2524 = vmatpush1.msra.mxu0 0.0
        %2525 = vmatprep.subr.mxu0 0.0
        %2526 = vmatpush1.msra.mxu0 0.0
        %2527 = vmatprep.subr.mxu0 0.0
        %2528 = vmatpush1.msra.mxu0 0.0
        %2529 = vmatprep.subr.mxu0 0.0
        %2530 = vmatpush1.msra.mxu0 0.0
        %2531 = vmatprep.subr.mxu0 0.0
        %2532 = vmatpush1.msra.mxu0 0.0
        %2533 = vmatprep.subr.mxu0 0.0
        %2534 = vmatpush1.msra.mxu0 0.0
        %2535 = vmatprep.subr.mxu0 0.0
        %2536 = vmatpush1.msra.mxu0 0.0
        %2537 = vmatprep.subr.mxu0 0.0
        %2538 = vmatpush1.msra.mxu0 0.0
        %2539 = vmatprep.subr.mxu0 0.0
        %2540 = vmatpush1.msra.mxu0 0.0
        %2541 = vmatprep.subr.mxu0 0.0
        %2542 = vmatpush1.msra.mxu0 0.0
        %2543 = vmatprep.subr.mxu0 0.0
        %2544 = vmatpush1.msra.mxu0 0.0
        %2545 = vmatprep.subr.mxu0 0.0
        %2546 = vmatpush1.msra.mxu0 0.0
        %2547 = vmatprep.subr.mxu0 0.0
        %2548 = vmatpush1.msra.mxu0 0.0
        %2549 = vmatprep.subr.mxu0 0.0
        %2550 = vmatpush1.msra.mxu0 0.0
        %2551 = vmatprep.mubr.f32.mxu0 0.0
        %2552 = vmatmul.mubr.f32.gmra.mrb[0].mxu0 %v1009
        %v2553 = vpop.f32.mrb[0].mxu0
        %v2554 = vadd.f32 0.0, %v2553
        %v2555 = vpop.f32.mrb[0].mxu0
        %2556 = vmatprep.mubr.f32.mxu0 0.0
        %2557 = vmatmul.mubr.f32.gmra.mrb[0].mxu0 %v1012
        %v2558 = vpop.f32.mrb[0].mxu0
        %v2559 = vadd.f32 0.0, %v2558
        %v2560 = vpop.f32.mrb[0].mxu0
        %2561 = vmatprep.mubr.f32.mxu0 0.0
        %2562 = vmatmul.mubr.f32.gmra.mrb[0].mxu0 %v1015
        %v2563 = vpop.f32.mrb[0].mxu0
        %v2564 = vadd.f32 0.0, %v2563
        %v2565 = vpop.f32.mrb[0].mxu0
        %2566 = vmatprep.mubr.f32.mxu0 0.0
        %2567 = vmatmul.mubr.f32.gmra.mrb[0].mxu0 %v1018
        %v2568 = vpop.f32.mrb[0].mxu0
        %v2569 = vadd.f32 0.0, %v2568
        %v2570 = vpop.f32.mrb[0].mxu0
        %2571 = vmatprep.mubr.f32.mxu0 0.0
        %2572 = vmatmul.mubr.f32.gmra.mrb[0].mxu0 %v1021
        %v2573 = vpop.f32.mrb[0].mxu0
        %v2574 = vadd.f32 0.0, %v2573
        %v2575 = vpop.f32.mrb[0].mxu0
        %2576 = vmatprep.mubr.f32.mxu0 0.0
        %2577 = vmatmul.mubr.f32.gmra.mrb[0].mxu0 %v1024
        %v2578 = vpop.f32.mrb[0].mxu0
        %v2579 = vadd.f32 0.0, %v2578
        %v2580 = vpop.f32.mrb[0].mxu0
        %2581 = vmatprep.mubr.f32.mxu0 0.0
        %2582 = vmatmul.mubr.f32.gmra.mrb[0].mxu0 %v1027
        %v2583 = vpop.f32.mrb[0].mxu0
        %v2584 = vadd.f32 0.0, %v2583
        %v2585 = vpop.f32.mrb[0].mxu0
        %2586 = vmatprep.mubr.f32.mxu0 0.0
        %2587 = vmatmul.mubr.f32.gmra.mrb[0].mxu0 %v1030
        %v2588 = vpop.f32.mrb[0].mxu0
        %v2589 = vadd.f32 0.0, %v2588
        %v2590 = vpop.f32.mrb[0].mxu0
        %2591 = vmatprep.mubr.f32.mxu0 0.0
        %2592 = vmatmul.mubr.f32.gmra.mrb[0].mxu0 %v1033
        %v2593 = vpop.f32.mrb[0].mxu0
        %v2594 = vadd.f32 0.0, %v2593
        %v2595 = vpop.f32.mrb[0].mxu0
        %2596 = vmatprep.mubr.f32.mxu0 0.0
        %2597 = vmatmul.mubr.f32.gmra.mrb[0].mxu0 %v1036
        %v2598 = vpop.f32.mrb[0].mxu0
        %v2599 = vadd.f32 0.0, %v2598
        %v2600 = vpop.f32.mrb[0].mxu0
        %2601 = vmatprep.mubr.f32.mxu0 0.0
        %2602 = vmatmul.mubr.f32.gmra.mrb[0].mxu0 %v1039
        %v2603 = vpop.f32.mrb[0].mxu0
        %v2604 = vadd.f32 0.0, %v2603
        %v2605 = vpop.f32.mrb[0].mxu0
        %2606 = vmatprep.mubr.f32.mxu0 0.0
        %2607 = vmatmul.mubr.f32.gmra.mrb[0].mxu0 %v1042
        %v2608 = vpop.f32.mrb[0].mxu0
        %v2609 = vadd.f32 0.0, %v2608
        %v2610 = vpop.f32.mrb[0].mxu0
        %2611 = vmatprep.mubr.f32.mxu0 0.0
        %2612 = vmatmul.mubr.f32.gmra.mrb[0].mxu0 %v1045
        %v2613 = vpop.f32.mrb[0].mxu0
        %v2614 = vadd.f32 0.0, %v2613
        %v2615 = vpop.f32.mrb[0].mxu0
        %2616 = vmatprep.mubr.f32.mxu0 0.0
        %2617 = vmatmul.mubr.f32.gmra.mrb[0].mxu0 %v1048
        %v2618 = vpop.f32.mrb[0].mxu0
        %v2619 = vadd.f32 0.0, %v2618
        %v2620 = vpop.f32.mrb[0].mxu0
        %2621 = vmatprep.mubr.f32.mxu0 0.0
        %2622 = vmatmul.mubr.f32.gmra.mrb[0].mxu0 %v1051
        %v2623 = vpop.f32.mrb[0].mxu0
        %v2624 = vadd.f32 0.0, %v2623
        %v2625 = vpop.f32.mrb[0].mxu0
        %2626 = vmatprep.mubr.f32.mxu0 0.0
        %2627 = vmatmul.mubr.f32.gmra.mrb[0].mxu0 %v1054
        %v2628 = vpop.f32.mrb[0].mxu0
        %v2629 = vadd.f32 0.0, %v2628
        %v2630 = vpop.f32.mrb[0].mxu0
        %2631 = vdwg.mxu0
        %v2632 = vmul.f32 %v2408, %v2554
        %v2633 = vmul.f32 %v2413, %v2559
        %v2634 = vmul.f32 %v2418, %v2564
        %v2635 = vmul.f32 %v2423, %v2569
        %v2636 = vmul.f32 %v2428, %v2574
        %v2637 = vmul.f32 %v2433, %v2579
        %v2638 = vmul.f32 %v2438, %v2584
        %v2639 = vmul.f32 %v2443, %v2589
        %v2640 = vmul.f32 %v2448, %v2594
        %v2641 = vmul.f32 %v2453, %v2599
        %v2642 = vmul.f32 %v2458, %v2604
        %v2643 = vmul.f32 %v2463, %v2609
        %v2644 = vmul.f32 %v2468, %v2614
        %v2645 = vmul.f32 %v2473, %v2619
        %v2646 = vmul.f32 %v2478, %v2624
        %v2647 = vmul.f32 %v2483, %v2629
        %v2648 = vsel %vm521, %v2632, 0.0
        %v2649 = vsel %vm521, %v2633, 0.0
        %v2650 = vadd.f32 %v2648, %v2649
        %v2651 = vrot.slane %v2650, 4
        %v2652 = vadd.f32 %v2650, %v2651
        %v2653 = vrot.slane %v2652, 2
        %v2654 = vadd.f32 %v2652, %v2653
        %v2655 = vrot.slane %v2654, 1
        %v2656 = vadd.f32 %v2654, %v2655
        %v2657 = vsel %vm521, %v2634, 0.0
        %v2658 = vsel %vm521, %v2635, 0.0
        %v2659 = vadd.f32 %v2657, %v2658
        %v2660 = vrot.slane %v2659, 4
        %v2661 = vadd.f32 %v2659, %v2660
        %v2662 = vrot.slane %v2661, 2
        %v2663 = vadd.f32 %v2661, %v2662
        %v2664 = vrot.slane %v2663, 1
        %v2665 = vadd.f32 %v2663, %v2664
        %v2666 = vsel %vm521, %v2636, 0.0
        %v2667 = vsel %vm521, %v2637, 0.0
        %v2668 = vadd.f32 %v2666, %v2667
        %v2669 = vrot.slane %v2668, 4
        %v2670 = vadd.f32 %v2668, %v2669
        %v2671 = vrot.slane %v2670, 2
        %v2672 = vadd.f32 %v2670, %v2671
        %v2673 = vrot.slane %v2672, 1
        %v2674 = vadd.f32 %v2672, %v2673
        %v2675 = vsel %vm521, %v2638, 0.0
        %v2676 = vsel %vm521, %v2639, 0.0
        %v2677 = vadd.f32 %v2675, %v2676
        %v2678 = vrot.slane %v2677, 4
        %v2679 = vadd.f32 %v2677, %v2678
        %v2680 = vrot.slane %v2679, 2
        %v2681 = vadd.f32 %v2679, %v2680
        %v2682 = vrot.slane %v2681, 1
        %v2683 = vadd.f32 %v2681, %v2682
        %v2684 = vsel %vm521, %v2640, 0.0
        %v2685 = vsel %vm521, %v2641, 0.0
        %v2686 = vadd.f32 %v2684, %v2685
        %v2687 = vrot.slane %v2686, 4
        %v2688 = vadd.f32 %v2686, %v2687
        %v2689 = vrot.slane %v2688, 2
        %v2690 = vadd.f32 %v2688, %v2689
        %v2691 = vrot.slane %v2690, 1
        %v2692 = vadd.f32 %v2690, %v2691
        %v2693 = vsel %vm521, %v2642, 0.0
        %v2694 = vsel %vm521, %v2643, 0.0
        %v2695 = vadd.f32 %v2693, %v2694
        %v2696 = vrot.slane %v2695, 4
        %v2697 = vadd.f32 %v2695, %v2696
        %v2698 = vrot.slane %v2697, 2
        %v2699 = vadd.f32 %v2697, %v2698
        %v2700 = vrot.slane %v2699, 1
        %v2701 = vadd.f32 %v2699, %v2700
        %v2702 = vsel %vm521, %v2644, 0.0
        %v2703 = vsel %vm521, %v2645, 0.0
        %v2704 = vadd.f32 %v2702, %v2703
        %v2705 = vrot.slane %v2704, 4
        %v2706 = vadd.f32 %v2704, %v2705
        %v2707 = vrot.slane %v2706, 2
        %v2708 = vadd.f32 %v2706, %v2707
        %v2709 = vrot.slane %v2708, 1
        %v2710 = vadd.f32 %v2708, %v2709
        %v2711 = vsel %vm521, %v2646, 0.0
        %v2712 = vsel %vm521, %v2647, 0.0
        %v2713 = vadd.f32 %v2711, %v2712
        %v2714 = vrot.slane %v2713, 4
        %v2715 = vadd.f32 %v2713, %v2714
        %v2716 = vrot.slane %v2715, 2
        %v2717 = vadd.f32 %v2715, %v2716
        %v2718 = vrot.slane %v2717, 1
        %v2719 = vadd.f32 %v2717, %v2718
        %v2720 = vmul.f32 %v2656, 0.16666667
        %v2721 = vmul.f32 %v2665, 0.16666667
        %v2722 = vmul.f32 %v2674, 0.16666667
        %v2723 = vmul.f32 %v2683, 0.16666667
        %v2724 = vmul.f32 %v2692, 0.16666667
        %v2725 = vmul.f32 %v2701, 0.16666667
        %v2726 = vmul.f32 %v2710, 0.16666667
        %v2727 = vmul.f32 %v2719, 0.16666667
        %vm2736 = vcmask 1041409
        %v2737 = vsel %vm2736, %v2721, %v2720
        %vm2738 = vcmask 1042434
        %v2739 = vsel %vm2738, %v2722, %v2737
        %vm2740 = vcmask 1043459
        %v2741 = vsel %vm2740, %v2723, %v2739
        %vm2742 = vcmask 1044484
        %v2743 = vsel %vm2742, %v2724, %v2741
        %vm2744 = vcmask 1045509
        %v2745 = vsel %vm2744, %v2725, %v2743
        %vm2746 = vcmask 1046534
        %v2747 = vsel %vm2746, %v2726, %v2745
        %vm2748 = vcmask 1047559
        %v2749 = vsel %vm2748, %v2727, %v2747
        %2751 = vst.msk [vmem:[%s499] sm:$0xff] %vm521, %v2749
        %s2752 = sand.u32 %s343, 1
        %s2753 = scalar_lea.sflag [#allocation4], %s2752
        %s2754 = sand.u32 %s343, 1
        %s2755 = smul.addr %s2754, 8
        %s2756 = scalar_lea.vmem [#allocation5], %s2755
        // Predicated region
        $region81: #{tpu_custom_call.1} parent=75 // pred_check
          %p2757 = pneg %p353
        $region82: #{tpu_custom_call.1} parent=75 // pred_check_branch
          %2759 = sbr.rel (%p2757) target = $region84
        $region83: #{tpu_custom_call.1} parent=75 // pred_region
          %s2761 = ssub.s32 128, 128
          %2762 = vsyncadd %s2753, %s2761
          %s2763 = smul.addr %s31, 128
          %s2764 = scalar_lea.hbm %s14, %s2763
          %s2766 = sshll.u32 %s2756, 4
          %s2767 = int_to_ptr.vmem [resolvable:$true] %s2766
          %2769 = dma.vmem_to_hbm [thread:$0]  %s2767, 128, %s2764, %s2753
        $region84: #{tpu_custom_call.1} parent=75 // pred_fallthru
          _
      $region76: #{tpu_custom_call.1} parent=5 // pred_fallthru
        _
      %p2770 = scmp.le.s32.totalorder 2, %s26
      // Predicated region
      $region85: #{tpu_custom_call.1} parent=5 // pred_check
        %p2771 = pneg %p2770
      $region86: #{tpu_custom_call.1} parent=5 // pred_check_branch
        %2773 = sbr.rel (%p2771) target = $region88
      $region87: #{tpu_custom_call.1} parent=5 // pred_region
        %s2774 = ssub.s32 %s26, 2
        // Predicated region
        $region89: #{tpu_custom_call.1} parent=87 // pred_check
          %p2775 = pneg %p359
        $region90: #{tpu_custom_call.1} parent=87 // pred_check_branch
          %2777 = sbr.rel (%p2775) target = $region92
        $region91: #{tpu_custom_call.1} parent=87 // pred_region
          %s2778 = sand.u32 %s344, 1
          %s2779 = scalar_lea.sflag [#allocation4], %s2778
          %s2780 = sand.u32 %s344, 1
          %s2781 = smul.addr %s2780, 8
          %s2782 = scalar_lea.vmem [#allocation5], %s2781
          %2783 = dma.done %s2779, 128
        $region92: #{tpu_custom_call.1} parent=87 // pred_fallthru
          _
      $region88: #{tpu_custom_call.1} parent=5 // pred_fallthru
        _
    $region6: #{tpu_custom_call.1} parent=1 // loop_footer
      %s30 = sadd.s32 1, %s26
    $region7: #{tpu_custom_call.1} parent=1 // loop_footer_branch
      %25 = sbr.rel target = $region3
    $region8: #{tpu_custom_call.1} parent=1 // loop_exit
      _
    %2784 = vsyncpa [#allocation3], 1
    %s2785 = scalar_lea.sflag [#allocation3], 1
    %2786 = vsyncpa %s2785, 1
    %2787 = vsyncpa [#allocation4], 1
    %s2788 = scalar_lea.sflag [#allocation4], 1
    %2789 = vsyncpa %s2788, 1

</llo_original>
